<compile_context>
chip_gen: v5e
topology: v5e:2x2
jax: 0.10.0
libtpu: 0.0.40
codegen_flags: <defaults>
</compile_context>

<pallas_src>
import math

import jax
import jax.numpy as jnp
from jax import lax
from jax.experimental import pallas as pl
from jax.experimental.pallas import tpu as pltpu

# ----------------------------- small config ---------------------------------
VOCAB = 128
HIDDEN = 32
N_HEADS = 4
HEAD_DIM = HIDDEN // N_HEADS
INTERMEDIATE = 64
NUM_DECODERS = 2          # num_decoders (first half of the stack)
MAX_POS = 32              # max_position_embeddings
EPS = 1e-6                # LlamaRMSNorm eps

BATCH = 2
SEQ = 8


# ------------------------- fused decoder-stack kernel ------------------------
def _llama_stack_kernel(x_ref, cos_ref, sin_ref,
                        ln1_ref, wqkv_ref, ln2_ref, wgu_ref, wd_ref,
                        out_ref):
    """One grid step == one batch element; all decoder layers unrolled inside."""
    S, H = x_ref.shape
    L = wqkv_ref.shape[0]

    x = x_ref[...]                    # (S, H) embeddings for this batch element
    cos = cos_ref[...]                # (S, H) RoPE cos, tiled per head
    sin = sin_ref[...]                # (S, H) RoPE sin, tiled per head

    # Causal mask built in-register (no DMA, no O(T^2) VMEM residency).
    row = lax.broadcasted_iota(jnp.int32, (S, S), 0)
    col = lax.broadcasted_iota(jnp.int32, (S, S), 1)
    allowed = col <= row

    for l in range(L):                # fully unrolled layer loop (weights resident)
        ln1 = ln1_ref[l]              # (1, H)
        wqkv = wqkv_ref[l]            # (H, 8H) = (32, 256): [qs, qsP, k, kP, V·Wo]
        ln2 = ln2_ref[l]              # (1, H)
        wgu = wgu_ref[l]              # (H, 2*INTERMEDIATE) = (32, 128)
        wd = wd_ref[l]                # (INTERMEDIATE, H)

        # ---- input RMSNorm ----
        var = jnp.mean(x * x, axis=-1, keepdims=True)
        xn = x * lax.rsqrt(var + EPS) * ln1

        # ---- fused projection: q*scale, (q*scale)@P, k, k@P, per-head V·Wo ----
        proj = jnp.dot(xn, wqkv, preferred_element_type=jnp.float32)  # (S, 256)
        q = proj[:, 0:H]              # already scaled by 1/sqrt(head_dim)
        qp = proj[:, H:2 * H]
        k = proj[:, 2 * H:3 * H]
        kp = proj[:, 3 * H:4 * H]
        vwo = proj[:, 4 * H:]         # (S, N_HEADS*H): head h at [h*H:(h+1)*H]

        # ---- RoPE (rotate_half folded into the weights; pure VPU here) ----
        q = q * cos + qp * sin
        k = k * cos + kp * sin

        # ---- attention: per-head scores + softmax, output via P·(V·Wo) ----
        attn = jnp.zeros_like(x)
        for h in range(N_HEADS):
            lo = h * HEAD_DIM
            hi = lo + HEAD_DIM
            s = lax.dot_general(q[:, lo:hi], k[:, lo:hi],
                                (((1,), (1,)), ((), ())),
                                preferred_element_type=jnp.float32)   # (S, S)
            s = jnp.where(allowed, s, -1e30)
            s = s - jnp.max(s, axis=-1, keepdims=True)
            p = jnp.exp(s)
            p = p * pl.reciprocal(jnp.sum(p, axis=-1, keepdims=True),
                                  approx=True)
            attn = attn + jnp.dot(p, vwo[:, h * H:(h + 1) * H],
                                  preferred_element_type=jnp.float32)

        h1 = x + attn                                                 # residual 1

        # ---- post-attention RMSNorm + fused SwiGLU MLP ----
        var2 = jnp.mean(h1 * h1, axis=-1, keepdims=True)
        hn = h1 * lax.rsqrt(var2 + EPS) * ln2

        gu = jnp.dot(hn, wgu, preferred_element_type=jnp.float32)     # (S, 128)
        g = gu[:, :INTERMEDIATE]
        u = gu[:, INTERMEDIATE:]
        g = g * jax.nn.sigmoid(g)                                     # SiLU
        mlp = jnp.dot(g * u, wd, preferred_element_type=jnp.float32)

        x = h1 + mlp                                                  # residual 2

    out_ref[...] = x


def _run_decoder_stack(x, cos, sin, layers, seq_len):
    """x: (B*S, H) packed hidden states -> (B*S, H) after NUM_DECODERS layers."""
    T, H = x.shape
    B = T // seq_len

    in_specs = [
        pl.BlockSpec((seq_len, H), lambda b: (b, 0)),                 # embeds
        pl.BlockSpec((seq_len, H), lambda b: (0, 0)),                 # cos
        pl.BlockSpec((seq_len, H), lambda b: (0, 0)),                 # sin
        pl.BlockSpec(layers["ln1"].shape, lambda b: (0, 0, 0)),       # (L,1,H)
        pl.BlockSpec(layers["wqkv"].shape, lambda b: (0, 0, 0)),      # (L,H,8H)
        pl.BlockSpec(layers["ln2"].shape, lambda b: (0, 0, 0)),       # (L,1,H)
        pl.BlockSpec(layers["wgu"].shape, lambda b: (0, 0, 0)),       # (L,H,2I)
        pl.BlockSpec(layers["wd"].shape, lambda b: (0, 0, 0)),        # (L,I,H)
    ]
    out_spec = pl.BlockSpec((seq_len, H), lambda b: (b, 0))

    return pl.pallas_call(
        _llama_stack_kernel,
        out_shape=jax.ShapeDtypeStruct((T, H), jnp.float32),
        grid_spec=pltpu.PrefetchScalarGridSpec(
            num_scalar_prefetch=0,
            grid=(B,),
            in_specs=in_specs,
            out_specs=out_spec,
        ),
        compiler_params=pltpu.CompilerParams(
            dimension_semantics=("parallel",)),   # batches independent -> 2 TCs on v7x
    )(x, cos, sin,
      layers["ln1"], layers["wqkv"], layers["ln2"],
      layers["wgu"], layers["wd"])


# ------------------------------ model glue -----------------------------------
def _rotate_half_matrix():
    """(H, H) block-diagonal matrix so that rotate_half(t) == t @ P per head."""
    d = HEAD_DIM
    half = d // 2
    j = jnp.arange(d)
    src = jnp.where(j < half, j + half, j - half)        # source column for out j
    sign = jnp.where(j < half, -1.0, 1.0).astype(jnp.float32)
    p_head = (jnp.arange(d)[:, None] == src[None, :]).astype(jnp.float32)
    p_head = p_head * sign[None, :]
    return jnp.kron(jnp.eye(N_HEADS, dtype=jnp.float32), p_head)     # (H, H)


def make_params(key):
    """Deterministic synthetic parameters; per-layer tensors stacked on axis 0.

    RoPE's rotate_half, the 1/sqrt(head_dim) scale, and the per-head V·Wo
    products are constant-folded into a single fused (H, 8H) projection weight.
    """
    params = {}
    key, k_emb = jax.random.split(key)
    params["embed_tokens"] = (
        0.02 * jax.random.normal(k_emb, (VOCAB, HIDDEN), jnp.float32))

    rot_p = _rotate_half_matrix()
    scale = 1.0 / math.sqrt(HEAD_DIM)

    ln1s, ln2s, wqkvs, wgus, wds = [], [], [], [], []
    for _ in range(NUM_DECODERS):
        key, *ks = jax.random.split(key, 8)
        wq = 0.02 * jax.random.normal(ks[0], (HIDDEN, HIDDEN), jnp.float32)
        wk = 0.02 * jax.random.normal(ks[1], (HIDDEN, HIDDEN), jnp.float32)
        wv = 0.02 * jax.random.normal(ks[2], (HIDDEN, HIDDEN), jnp.float32)
        wo = 0.02 * jax.random.normal(ks[3], (HIDDEN, HIDDEN), jnp.float32)
        wg = 0.02 * jax.random.normal(ks[4], (HIDDEN, INTERMEDIATE), jnp.float32)
        wu = 0.02 * jax.random.normal(ks[5], (HIDDEN, INTERMEDIATE), jnp.float32)
        wd = 0.02 * jax.random.normal(ks[6], (INTERMEDIATE, HIDDEN), jnp.float32)

        wq_s = wq * scale                                  # fold attention scale
        # Per-head (Wv_h @ Wo_h) blocks: reassociates (P·V)·Wo -> P·(V·Wo).
        wvo = jnp.concatenate(
            [wv[:, h * HEAD_DIM:(h + 1) * HEAD_DIM]
             @ wo[h * HEAD_DIM:(h + 1) * HEAD_DIM, :]
             for h in range(N_HEADS)], axis=1)             # (H, N_HEADS*H)
        # Fused projection: [q*s, (q*s)@P, k, k@P, V·Wo]  -> (H, 256), lane-dense.
        wqkvs.append(jnp.concatenate(
            [wq_s, wq_s @ rot_p, wk, wk @ rot_p, wvo], axis=1))

        ln1s.append(jnp.ones((1, HIDDEN), jnp.float32))
        ln2s.append(jnp.ones((1, HIDDEN), jnp.float32))
        wgus.append(jnp.concatenate([wg, wu], axis=1))     # (H, 2I) = (32, 128)
        wds.append(wd)

    params["layers"] = {
        "ln1": jnp.stack(ln1s),      # (L, 1, H)
        "wqkv": jnp.stack(wqkvs),    # (L, H, 8H)
        "ln2": jnp.stack(ln2s),      # (L, 1, H)
        "wgu": jnp.stack(wgus),      # (L, H, 2I)
        "wd": jnp.stack(wds),        # (L, I, H)
    }
    return params


def _rope_tables(seq_len):
    inv_freq = 1.0 / (10000.0 ** (jnp.arange(0, HEAD_DIM, 2, dtype=jnp.float32)
                                  / HEAD_DIM))
    pos = jnp.arange(seq_len, dtype=jnp.float32)
    freqs = pos[:, None] * inv_freq[None, :]
    emb = jnp.concatenate([freqs, freqs], axis=-1)         # (S, head_dim)
    return jnp.cos(emb), jnp.sin(emb)


@jax.jit
def llama_first_half(input_ids, params):
    """Mirrors TtLlamaModelFirstHFModel.forward on the default-argument path.

    input_ids: (B, S) int32 -> hidden_states: (B, S, H) float32
    """
    B, S = input_ids.shape
    # Embedding lookup (gather) -- glue, not the hot path.
    x = jnp.take(params["embed_tokens"], input_ids.reshape(-1), axis=0)  # (B*S,H)

    cos, sin = _rope_tables(S)                             # (S, head_dim)
    cos_t = jnp.tile(cos, (1, N_HEADS))                    # (S, H)
    sin_t = jnp.tile(sin, (1, N_HEADS))                    # (S, H)

    out = _run_decoder_stack(x, cos_t, sin_t, params["layers"], S)

    # forward() also returns next_cache / all_hidden_states / all_self_attns,
    # which are empty / None on this default path.
    # TODO(synk): KV-cache (past_key_values) path not implemented.
    return out.reshape(B, S, HIDDEN)


if __name__ == "__main__":
    key = jax.random.PRNGKey(0)
    params = make_params(key)

    key_ids = jax.random.fold_in(key, 123)
    input_ids = jax.random.randint(key_ids, (BATCH, SEQ), 0, VOCAB,
                                   dtype=jnp.int32)

    out = llama_first_half(input_ids, params)
    out = jax.block_until_ready(out)

    assert out.shape == (BATCH, SEQ, HIDDEN)
    assert bool(jnp.all(jnp.isfinite(out)))
    print("KERNEL_OK")
</pallas_src>

<mosaic_0001>
module attributes {stable_mosaic.version = 11 : i64} {
  func.func @_llama_stack_kernel(%arg0: i32, %arg1: memref<8x32xf32, #tpu.memory_space<vmem>>, %arg2: memref<8x32xf32, #tpu.memory_space<vmem>>, %arg3: memref<8x32xf32, #tpu.memory_space<vmem>>, %arg4: memref<2x1x32xf32, #tpu.memory_space<vmem>>, %arg5: memref<2x32x256xf32, #tpu.memory_space<vmem>>, %arg6: memref<2x1x32xf32, #tpu.memory_space<vmem>>, %arg7: memref<2x32x128xf32, #tpu.memory_space<vmem>>, %arg8: memref<2x64x32xf32, #tpu.memory_space<vmem>>, %arg9: memref<8x32xf32, #tpu.memory_space<vmem>>) attributes {dimension_semantics = [#tpu.dimension_semantics<parallel>], iteration_bounds = array<i64: 2>, scalar_prefetch = 0 : i64, scratch_operands = 0 : i64, tpu.core_type = #tpu.core_type<tc>, window_params = [{transform_indices = @transform_0, window_bounds = array<i64: 8, 32>}, {pipeline_mode = #tpu.pipeline_mode<synchronous>, transform_indices = @transform_1, window_bounds = array<i64: 8, 32>}, {pipeline_mode = #tpu.pipeline_mode<synchronous>, transform_indices = @transform_2, window_bounds = array<i64: 8, 32>}, {pipeline_mode = #tpu.pipeline_mode<synchronous>, transform_indices = @transform_3, window_bounds = array<i64: 2, 1, 32>}, {pipeline_mode = #tpu.pipeline_mode<synchronous>, transform_indices = @transform_4, window_bounds = array<i64: 2, 32, 256>}, {pipeline_mode = #tpu.pipeline_mode<synchronous>, transform_indices = @transform_5, window_bounds = array<i64: 2, 1, 32>}, {pipeline_mode = #tpu.pipeline_mode<synchronous>, transform_indices = @transform_6, window_bounds = array<i64: 2, 32, 128>}, {pipeline_mode = #tpu.pipeline_mode<synchronous>, transform_indices = @transform_7, window_bounds = array<i64: 2, 64, 32>}, {transform_indices = @transform_8, window_bounds = array<i64: 8, 32>}]} {
    %c0 = arith.constant 0 : index
    %c0_0 = arith.constant 0 : index
    %0 = vector.load %arg1[%c0, %c0_0] : memref<8x32xf32, #tpu.memory_space<vmem>>, vector<8x32xf32>
    %c0_1 = arith.constant 0 : index
    %c0_2 = arith.constant 0 : index
    %1 = vector.load %arg2[%c0_1, %c0_2] : memref<8x32xf32, #tpu.memory_space<vmem>>, vector<8x32xf32>
    %c0_3 = arith.constant 0 : index
    %c0_4 = arith.constant 0 : index
    %2 = vector.load %arg3[%c0_3, %c0_4] : memref<8x32xf32, #tpu.memory_space<vmem>>, vector<8x32xf32>
    %3 = tpu.iota {dimensions = array<i32: 0>} : vector<8x8xi32>
    %4 = tpu.iota {dimensions = array<i32: 1>} : vector<8x8xi32>
    %5 = arith.cmpi sle, %4, %3 : vector<8x8xi32>
    %c0_5 = arith.constant 0 : index
    %c0_6 = arith.constant 0 : index
    %c0_7 = arith.constant 0 : index
    %6 = vector.load %arg4[%c0_5, %c0_6, %c0_7] : memref<2x1x32xf32, #tpu.memory_space<vmem>>, vector<1x1x32xf32>
    %7 = vector.shape_cast %6 : vector<1x1x32xf32> to vector<1x32xf32>
    %c0_8 = arith.constant 0 : index
    %c0_9 = arith.constant 0 : index
    %c0_10 = arith.constant 0 : index
    %8 = vector.load %arg5[%c0_8, %c0_9, %c0_10] : memref<2x32x256xf32, #tpu.memory_space<vmem>>, vector<1x32x256xf32>
    %9 = vector.shape_cast %8 : vector<1x32x256xf32> to vector<32x256xf32>
    %c0_11 = arith.constant 0 : index
    %c0_12 = arith.constant 0 : index
    %c0_13 = arith.constant 0 : index
    %10 = vector.load %arg6[%c0_11, %c0_12, %c0_13] : memref<2x1x32xf32, #tpu.memory_space<vmem>>, vector<1x1x32xf32>
    %11 = vector.shape_cast %10 : vector<1x1x32xf32> to vector<1x32xf32>
    %c0_14 = arith.constant 0 : index
    %c0_15 = arith.constant 0 : index
    %c0_16 = arith.constant 0 : index
    %12 = vector.load %arg7[%c0_14, %c0_15, %c0_16] : memref<2x32x128xf32, #tpu.memory_space<vmem>>, vector<1x32x128xf32>
    %13 = vector.shape_cast %12 : vector<1x32x128xf32> to vector<32x128xf32>
    %c0_17 = arith.constant 0 : index
    %c0_18 = arith.constant 0 : index
    %c0_19 = arith.constant 0 : index
    %14 = vector.load %arg8[%c0_17, %c0_18, %c0_19] : memref<2x64x32xf32, #tpu.memory_space<vmem>>, vector<1x64x32xf32>
    %15 = vector.shape_cast %14 : vector<1x64x32xf32> to vector<64x32xf32>
    %16 = arith.mulf %0, %0 : vector<8x32xf32>
    %cst = arith.constant dense<0.000000e+00> : vector<8xf32>
    %17 = vector.multi_reduction <add>, %16, %cst [1] : vector<8x32xf32> to vector<8xf32>
    %18 = vector.shape_cast %17 : vector<8xf32> to vector<8x1xf32>
    %cst_20 = arith.constant 3.200000e+01 : f32
    %19 = vector.broadcast %cst_20 : f32 to vector<8x1xf32>
    %20 = arith.divf %18, %19 : vector<8x1xf32>
    %cst_21 = arith.constant 9.99999997E-7 : f32
    %21 = vector.broadcast %cst_21 : f32 to vector<8x1xf32>
    %22 = arith.addf %20, %21 : vector<8x1xf32>
    %23 = math.rsqrt %22 : vector<8x1xf32>
    %24 = vector.broadcast %23 : vector<8x1xf32> to vector<8x32xf32>
    %25 = arith.mulf %0, %24 : vector<8x32xf32>
    %26 = vector.broadcast %7 : vector<1x32xf32> to vector<8x32xf32>
    %27 = arith.mulf %25, %26 : vector<8x32xf32>
    %cst_22 = arith.constant dense<0.000000e+00> : vector<8x256xf32>
    %28 = tpu.matmul %27, %9, %cst_22 {dimension_numbers = #tpu.dot_dimension_numbers<[1], [0], [0], [1], [0, 0, 1, 1], [], []>} : vector<8x32xf32>, vector<32x256xf32>, vector<8x256xf32> -> vector<8x256xf32>
    %29 = vector.extract_strided_slice %28 {offsets = [0, 0], sizes = [8, 32], strides = [1, 1]} : vector<8x256xf32> to vector<8x32xf32>
    %30 = vector.extract_strided_slice %28 {offsets = [0, 32], sizes = [8, 32], strides = [1, 1]} : vector<8x256xf32> to vector<8x32xf32>
    %31 = vector.extract_strided_slice %28 {offsets = [0, 64], sizes = [8, 32], strides = [1, 1]} : vector<8x256xf32> to vector<8x32xf32>
    %32 = vector.extract_strided_slice %28 {offsets = [0, 96], sizes = [8, 32], strides = [1, 1]} : vector<8x256xf32> to vector<8x32xf32>
    %33 = vector.extract_strided_slice %28 {offsets = [0, 128], sizes = [8, 128], strides = [1, 1]} : vector<8x256xf32> to vector<8x128xf32>
    %34 = arith.mulf %29, %1 : vector<8x32xf32>
    %35 = arith.mulf %30, %2 : vector<8x32xf32>
    %36 = arith.addf %34, %35 : vector<8x32xf32>
    %37 = arith.mulf %31, %1 : vector<8x32xf32>
    %38 = arith.mulf %32, %2 : vector<8x32xf32>
    %39 = arith.addf %37, %38 : vector<8x32xf32>
    %cst_23 = arith.constant 0.000000e+00 : f32
    %40 = vector.broadcast %cst_23 : f32 to vector<8x32xf32>
    %41 = vector.extract_strided_slice %36 {offsets = [0, 0], sizes = [8, 8], strides = [1, 1]} : vector<8x32xf32> to vector<8x8xf32>
    %42 = vector.extract_strided_slice %39 {offsets = [0, 0], sizes = [8, 8], strides = [1, 1]} : vector<8x32xf32> to vector<8x8xf32>
    %cst_24 = arith.constant dense<0.000000e+00> : vector<8x8xf32>
    %43 = tpu.matmul %41, %42, %cst_24 {dimension_numbers = #tpu.dot_dimension_numbers<[1], [1], [0], [0], [0, 0, 1, 0], [], []>} : vector<8x8xf32>, vector<8x8xf32>, vector<8x8xf32> -> vector<8x8xf32>
    %cst_25 = arith.constant -1.000000e+30 : f32
    %44 = vector.broadcast %cst_25 : f32 to vector<8x8xf32>
    %45 = arith.select %5, %43, %44 : vector<8x8xi1>, vector<8x8xf32>
    %cst_26 = arith.constant dense<0xFF800000> : vector<8xf32>
    %46 = vector.multi_reduction <maximumf>, %45, %cst_26 [1] : vector<8x8xf32> to vector<8xf32>
    %47 = vector.shape_cast %46 : vector<8xf32> to vector<8x1xf32>
    %48 = vector.broadcast %47 : vector<8x1xf32> to vector<8x8xf32>
    %49 = arith.subf %45, %48 : vector<8x8xf32>
    %50 = math.exp %49 : vector<8x8xf32>
    %cst_27 = arith.constant dense<0.000000e+00> : vector<8xf32>
    %51 = vector.multi_reduction <add>, %50, %cst_27 [1] : vector<8x8xf32> to vector<8xf32>
    %52 = vector.shape_cast %51 : vector<8xf32> to vector<8x1xf32>
    %53 = tpu.reciprocal %52 {approx = true} : vector<8x1xf32> -> vector<8x1xf32>
    %54 = vector.broadcast %53 : vector<8x1xf32> to vector<8x8xf32>
    %55 = arith.mulf %50, %54 : vector<8x8xf32>
    %56 = vector.extract_strided_slice %33 {offsets = [0, 0], sizes = [8, 32], strides = [1, 1]} : vector<8x128xf32> to vector<8x32xf32>
    %cst_28 = arith.constant dense<0.000000e+00> : vector<8x32xf32>
    %57 = tpu.matmul %55, %56, %cst_28 {dimension_numbers = #tpu.dot_dimension_numbers<[1], [0], [0], [1], [0, 0, 1, 1], [], []>} : vector<8x8xf32>, vector<8x32xf32>, vector<8x32xf32> -> vector<8x32xf32>
    %58 = arith.addf %40, %57 : vector<8x32xf32>
    %59 = vector.extract_strided_slice %36 {offsets = [0, 8], sizes = [8, 8], strides = [1, 1]} : vector<8x32xf32> to vector<8x8xf32>
    %60 = vector.extract_strided_slice %39 {offsets = [0, 8], sizes = [8, 8], strides = [1, 1]} : vector<8x32xf32> to vector<8x8xf32>
    %cst_29 = arith.constant dense<0.000000e+00> : vector<8x8xf32>
    %61 = tpu.matmul %59, %60, %cst_29 {dimension_numbers = #tpu.dot_dimension_numbers<[1], [1], [0], [0], [0, 0, 1, 0], [], []>} : vector<8x8xf32>, vector<8x8xf32>, vector<8x8xf32> -> vector<8x8xf32>
    %cst_30 = arith.constant -1.000000e+30 : f32
    %62 = vector.broadcast %cst_30 : f32 to vector<8x8xf32>
    %63 = arith.select %5, %61, %62 : vector<8x8xi1>, vector<8x8xf32>
    %cst_31 = arith.constant dense<0xFF800000> : vector<8xf32>
    %64 = vector.multi_reduction <maximumf>, %63, %cst_31 [1] : vector<8x8xf32> to vector<8xf32>
    %65 = vector.shape_cast %64 : vector<8xf32> to vector<8x1xf32>
    %66 = vector.broadcast %65 : vector<8x1xf32> to vector<8x8xf32>
    %67 = arith.subf %63, %66 : vector<8x8xf32>
    %68 = math.exp %67 : vector<8x8xf32>
    %cst_32 = arith.constant dense<0.000000e+00> : vector<8xf32>
    %69 = vector.multi_reduction <add>, %68, %cst_32 [1] : vector<8x8xf32> to vector<8xf32>
    %70 = vector.shape_cast %69 : vector<8xf32> to vector<8x1xf32>
    %71 = tpu.reciprocal %70 {approx = true} : vector<8x1xf32> -> vector<8x1xf32>
    %72 = vector.broadcast %71 : vector<8x1xf32> to vector<8x8xf32>
    %73 = arith.mulf %68, %72 : vector<8x8xf32>
    %74 = vector.extract_strided_slice %33 {offsets = [0, 32], sizes = [8, 32], strides = [1, 1]} : vector<8x128xf32> to vector<8x32xf32>
    %cst_33 = arith.constant dense<0.000000e+00> : vector<8x32xf32>
    %75 = tpu.matmul %73, %74, %cst_33 {dimension_numbers = #tpu.dot_dimension_numbers<[1], [0], [0], [1], [0, 0, 1, 1], [], []>} : vector<8x8xf32>, vector<8x32xf32>, vector<8x32xf32> -> vector<8x32xf32>
    %76 = arith.addf %58, %75 : vector<8x32xf32>
    %77 = vector.extract_strided_slice %36 {offsets = [0, 16], sizes = [8, 8], strides = [1, 1]} : vector<8x32xf32> to vector<8x8xf32>
    %78 = vector.extract_strided_slice %39 {offsets = [0, 16], sizes = [8, 8], strides = [1, 1]} : vector<8x32xf32> to vector<8x8xf32>
    %cst_34 = arith.constant dense<0.000000e+00> : vector<8x8xf32>
    %79 = tpu.matmul %77, %78, %cst_34 {dimension_numbers = #tpu.dot_dimension_numbers<[1], [1], [0], [0], [0, 0, 1, 0], [], []>} : vector<8x8xf32>, vector<8x8xf32>, vector<8x8xf32> -> vector<8x8xf32>
    %cst_35 = arith.constant -1.000000e+30 : f32
    %80 = vector.broadcast %cst_35 : f32 to vector<8x8xf32>
    %81 = arith.select %5, %79, %80 : vector<8x8xi1>, vector<8x8xf32>
    %cst_36 = arith.constant dense<0xFF800000> : vector<8xf32>
    %82 = vector.multi_reduction <maximumf>, %81, %cst_36 [1] : vector<8x8xf32> to vector<8xf32>
    %83 = vector.shape_cast %82 : vector<8xf32> to vector<8x1xf32>
    %84 = vector.broadcast %83 : vector<8x1xf32> to vector<8x8xf32>
    %85 = arith.subf %81, %84 : vector<8x8xf32>
    %86 = math.exp %85 : vector<8x8xf32>
    %cst_37 = arith.constant dense<0.000000e+00> : vector<8xf32>
    %87 = vector.multi_reduction <add>, %86, %cst_37 [1] : vector<8x8xf32> to vector<8xf32>
    %88 = vector.shape_cast %87 : vector<8xf32> to vector<8x1xf32>
    %89 = tpu.reciprocal %88 {approx = true} : vector<8x1xf32> -> vector<8x1xf32>
    %90 = vector.broadcast %89 : vector<8x1xf32> to vector<8x8xf32>
    %91 = arith.mulf %86, %90 : vector<8x8xf32>
    %92 = vector.extract_strided_slice %33 {offsets = [0, 64], sizes = [8, 32], strides = [1, 1]} : vector<8x128xf32> to vector<8x32xf32>
    %cst_38 = arith.constant dense<0.000000e+00> : vector<8x32xf32>
    %93 = tpu.matmul %91, %92, %cst_38 {dimension_numbers = #tpu.dot_dimension_numbers<[1], [0], [0], [1], [0, 0, 1, 1], [], []>} : vector<8x8xf32>, vector<8x32xf32>, vector<8x32xf32> -> vector<8x32xf32>
    %94 = arith.addf %76, %93 : vector<8x32xf32>
    %95 = vector.extract_strided_slice %36 {offsets = [0, 24], sizes = [8, 8], strides = [1, 1]} : vector<8x32xf32> to vector<8x8xf32>
    %96 = vector.extract_strided_slice %39 {offsets = [0, 24], sizes = [8, 8], strides = [1, 1]} : vector<8x32xf32> to vector<8x8xf32>
    %cst_39 = arith.constant dense<0.000000e+00> : vector<8x8xf32>
    %97 = tpu.matmul %95, %96, %cst_39 {dimension_numbers = #tpu.dot_dimension_numbers<[1], [1], [0], [0], [0, 0, 1, 0], [], []>} : vector<8x8xf32>, vector<8x8xf32>, vector<8x8xf32> -> vector<8x8xf32>
    %cst_40 = arith.constant -1.000000e+30 : f32
    %98 = vector.broadcast %cst_40 : f32 to vector<8x8xf32>
    %99 = arith.select %5, %97, %98 : vector<8x8xi1>, vector<8x8xf32>
    %cst_41 = arith.constant dense<0xFF800000> : vector<8xf32>
    %100 = vector.multi_reduction <maximumf>, %99, %cst_41 [1] : vector<8x8xf32> to vector<8xf32>
    %101 = vector.shape_cast %100 : vector<8xf32> to vector<8x1xf32>
    %102 = vector.broadcast %101 : vector<8x1xf32> to vector<8x8xf32>
    %103 = arith.subf %99, %102 : vector<8x8xf32>
    %104 = math.exp %103 : vector<8x8xf32>
    %cst_42 = arith.constant dense<0.000000e+00> : vector<8xf32>
    %105 = vector.multi_reduction <add>, %104, %cst_42 [1] : vector<8x8xf32> to vector<8xf32>
    %106 = vector.shape_cast %105 : vector<8xf32> to vector<8x1xf32>
    %107 = tpu.reciprocal %106 {approx = true} : vector<8x1xf32> -> vector<8x1xf32>
    %108 = vector.broadcast %107 : vector<8x1xf32> to vector<8x8xf32>
    %109 = arith.mulf %104, %108 : vector<8x8xf32>
    %110 = vector.extract_strided_slice %33 {offsets = [0, 96], sizes = [8, 32], strides = [1, 1]} : vector<8x128xf32> to vector<8x32xf32>
    %cst_43 = arith.constant dense<0.000000e+00> : vector<8x32xf32>
    %111 = tpu.matmul %109, %110, %cst_43 {dimension_numbers = #tpu.dot_dimension_numbers<[1], [0], [0], [1], [0, 0, 1, 1], [], []>} : vector<8x8xf32>, vector<8x32xf32>, vector<8x32xf32> -> vector<8x32xf32>
    %112 = arith.addf %94, %111 : vector<8x32xf32>
    %113 = arith.addf %0, %112 : vector<8x32xf32>
    %114 = arith.mulf %113, %113 : vector<8x32xf32>
    %cst_44 = arith.constant dense<0.000000e+00> : vector<8xf32>
    %115 = vector.multi_reduction <add>, %114, %cst_44 [1] : vector<8x32xf32> to vector<8xf32>
    %116 = vector.shape_cast %115 : vector<8xf32> to vector<8x1xf32>
    %cst_45 = arith.constant 3.200000e+01 : f32
    %117 = vector.broadcast %cst_45 : f32 to vector<8x1xf32>
    %118 = arith.divf %116, %117 : vector<8x1xf32>
    %cst_46 = arith.constant 9.99999997E-7 : f32
    %119 = vector.broadcast %cst_46 : f32 to vector<8x1xf32>
    %120 = arith.addf %118, %119 : vector<8x1xf32>
    %121 = math.rsqrt %120 : vector<8x1xf32>
    %122 = vector.broadcast %121 : vector<8x1xf32> to vector<8x32xf32>
    %123 = arith.mulf %113, %122 : vector<8x32xf32>
    %124 = vector.broadcast %11 : vector<1x32xf32> to vector<8x32xf32>
    %125 = arith.mulf %123, %124 : vector<8x32xf32>
    %cst_47 = arith.constant dense<0.000000e+00> : vector<8x128xf32>
    %126 = tpu.matmul %125, %13, %cst_47 {dimension_numbers = #tpu.dot_dimension_numbers<[1], [0], [0], [1], [0, 0, 1, 1], [], []>} : vector<8x32xf32>, vector<32x128xf32>, vector<8x128xf32> -> vector<8x128xf32>
    %127 = vector.extract_strided_slice %126 {offsets = [0, 0], sizes = [8, 64], strides = [1, 1]} : vector<8x128xf32> to vector<8x64xf32>
    %128 = vector.extract_strided_slice %126 {offsets = [0, 64], sizes = [8, 64], strides = [1, 1]} : vector<8x128xf32> to vector<8x64xf32>
    %129 = arith.negf %127 : vector<8x64xf32>
    %130 = math.exp %129 : vector<8x64xf32>
    %cst_48 = arith.constant 1.000000e+00 : f32
    %131 = vector.broadcast %cst_48 : f32 to vector<8x64xf32>
    %132 = arith.addf %131, %130 : vector<8x64xf32>
    %133 = arith.divf %131, %132 : vector<8x64xf32>
    %134 = arith.mulf %127, %133 : vector<8x64xf32>
    %135 = arith.mulf %134, %128 : vector<8x64xf32>
    %cst_49 = arith.constant dense<0.000000e+00> : vector<8x32xf32>
    %136 = tpu.matmul %135, %15, %cst_49 {dimension_numbers = #tpu.dot_dimension_numbers<[1], [0], [0], [1], [0, 0, 1, 1], [], []>} : vector<8x64xf32>, vector<64x32xf32>, vector<8x32xf32> -> vector<8x32xf32>
    %137 = arith.addf %113, %136 : vector<8x32xf32>
    %c1 = arith.constant 1 : index
    %c0_50 = arith.constant 0 : index
    %c0_51 = arith.constant 0 : index
    %138 = vector.load %arg4[%c1, %c0_50, %c0_51] : memref<2x1x32xf32, #tpu.memory_space<vmem>>, vector<1x1x32xf32>
    %139 = vector.shape_cast %138 : vector<1x1x32xf32> to vector<1x32xf32>
    %c1_52 = arith.constant 1 : index
    %c0_53 = arith.constant 0 : index
    %c0_54 = arith.constant 0 : index
    %140 = vector.load %arg5[%c1_52, %c0_53, %c0_54] : memref<2x32x256xf32, #tpu.memory_space<vmem>>, vector<1x32x256xf32>
    %141 = vector.shape_cast %140 : vector<1x32x256xf32> to vector<32x256xf32>
    %c1_55 = arith.constant 1 : index
    %c0_56 = arith.constant 0 : index
    %c0_57 = arith.constant 0 : index
    %142 = vector.load %arg6[%c1_55, %c0_56, %c0_57] : memref<2x1x32xf32, #tpu.memory_space<vmem>>, vector<1x1x32xf32>
    %143 = vector.shape_cast %142 : vector<1x1x32xf32> to vector<1x32xf32>
    %c1_58 = arith.constant 1 : index
    %c0_59 = arith.constant 0 : index
    %c0_60 = arith.constant 0 : index
    %144 = vector.load %arg7[%c1_58, %c0_59, %c0_60] : memref<2x32x128xf32, #tpu.memory_space<vmem>>, vector<1x32x128xf32>
    %145 = vector.shape_cast %144 : vector<1x32x128xf32> to vector<32x128xf32>
    %c1_61 = arith.constant 1 : index
    %c0_62 = arith.constant 0 : index
    %c0_63 = arith.constant 0 : index
    %146 = vector.load %arg8[%c1_61, %c0_62, %c0_63] : memref<2x64x32xf32, #tpu.memory_space<vmem>>, vector<1x64x32xf32>
    %147 = vector.shape_cast %146 : vector<1x64x32xf32> to vector<64x32xf32>
    %148 = arith.mulf %137, %137 : vector<8x32xf32>
    %cst_64 = arith.constant dense<0.000000e+00> : vector<8xf32>
    %149 = vector.multi_reduction <add>, %148, %cst_64 [1] : vector<8x32xf32> to vector<8xf32>
    %150 = vector.shape_cast %149 : vector<8xf32> to vector<8x1xf32>
    %cst_65 = arith.constant 3.200000e+01 : f32
    %151 = vector.broadcast %cst_65 : f32 to vector<8x1xf32>
    %152 = arith.divf %150, %151 : vector<8x1xf32>
    %cst_66 = arith.constant 9.99999997E-7 : f32
    %153 = vector.broadcast %cst_66 : f32 to vector<8x1xf32>
    %154 = arith.addf %152, %153 : vector<8x1xf32>
    %155 = math.rsqrt %154 : vector<8x1xf32>
    %156 = vector.broadcast %155 : vector<8x1xf32> to vector<8x32xf32>
    %157 = arith.mulf %137, %156 : vector<8x32xf32>
    %158 = vector.broadcast %139 : vector<1x32xf32> to vector<8x32xf32>
    %159 = arith.mulf %157, %158 : vector<8x32xf32>
    %cst_67 = arith.constant dense<0.000000e+00> : vector<8x256xf32>
    %160 = tpu.matmul %159, %141, %cst_67 {dimension_numbers = #tpu.dot_dimension_numbers<[1], [0], [0], [1], [0, 0, 1, 1], [], []>} : vector<8x32xf32>, vector<32x256xf32>, vector<8x256xf32> -> vector<8x256xf32>
    %161 = vector.extract_strided_slice %160 {offsets = [0, 0], sizes = [8, 32], strides = [1, 1]} : vector<8x256xf32> to vector<8x32xf32>
    %162 = vector.extract_strided_slice %160 {offsets = [0, 32], sizes = [8, 32], strides = [1, 1]} : vector<8x256xf32> to vector<8x32xf32>
    %163 = vector.extract_strided_slice %160 {offsets = [0, 64], sizes = [8, 32], strides = [1, 1]} : vector<8x256xf32> to vector<8x32xf32>
    %164 = vector.extract_strided_slice %160 {offsets = [0, 96], sizes = [8, 32], strides = [1, 1]} : vector<8x256xf32> to vector<8x32xf32>
    %165 = vector.extract_strided_slice %160 {offsets = [0, 128], sizes = [8, 128], strides = [1, 1]} : vector<8x256xf32> to vector<8x128xf32>
    %166 = arith.mulf %161, %1 : vector<8x32xf32>
    %167 = arith.mulf %162, %2 : vector<8x32xf32>
    %168 = arith.addf %166, %167 : vector<8x32xf32>
    %169 = arith.mulf %163, %1 : vector<8x32xf32>
    %170 = arith.mulf %164, %2 : vector<8x32xf32>
    %171 = arith.addf %169, %170 : vector<8x32xf32>
    %cst_68 = arith.constant 0.000000e+00 : f32
    %172 = vector.broadcast %cst_68 : f32 to vector<8x32xf32>
    %173 = vector.extract_strided_slice %168 {offsets = [0, 0], sizes = [8, 8], strides = [1, 1]} : vector<8x32xf32> to vector<8x8xf32>
    %174 = vector.extract_strided_slice %171 {offsets = [0, 0], sizes = [8, 8], strides = [1, 1]} : vector<8x32xf32> to vector<8x8xf32>
    %cst_69 = arith.constant dense<0.000000e+00> : vector<8x8xf32>
    %175 = tpu.matmul %173, %174, %cst_69 {dimension_numbers = #tpu.dot_dimension_numbers<[1], [1], [0], [0], [0, 0, 1, 0], [], []>} : vector<8x8xf32>, vector<8x8xf32>, vector<8x8xf32> -> vector<8x8xf32>
    %cst_70 = arith.constant -1.000000e+30 : f32
    %176 = vector.broadcast %cst_70 : f32 to vector<8x8xf32>
    %177 = arith.select %5, %175, %176 : vector<8x8xi1>, vector<8x8xf32>
    %cst_71 = arith.constant dense<0xFF800000> : vector<8xf32>
    %178 = vector.multi_reduction <maximumf>, %177, %cst_71 [1] : vector<8x8xf32> to vector<8xf32>
    %179 = vector.shape_cast %178 : vector<8xf32> to vector<8x1xf32>
    %180 = vector.broadcast %179 : vector<8x1xf32> to vector<8x8xf32>
    %181 = arith.subf %177, %180 : vector<8x8xf32>
    %182 = math.exp %181 : vector<8x8xf32>
    %cst_72 = arith.constant dense<0.000000e+00> : vector<8xf32>
    %183 = vector.multi_reduction <add>, %182, %cst_72 [1] : vector<8x8xf32> to vector<8xf32>
    %184 = vector.shape_cast %183 : vector<8xf32> to vector<8x1xf32>
    %185 = tpu.reciprocal %184 {approx = true} : vector<8x1xf32> -> vector<8x1xf32>
    %186 = vector.broadcast %185 : vector<8x1xf32> to vector<8x8xf32>
    %187 = arith.mulf %182, %186 : vector<8x8xf32>
    %188 = vector.extract_strided_slice %165 {offsets = [0, 0], sizes = [8, 32], strides = [1, 1]} : vector<8x128xf32> to vector<8x32xf32>
    %cst_73 = arith.constant dense<0.000000e+00> : vector<8x32xf32>
    %189 = tpu.matmul %187, %188, %cst_73 {dimension_numbers = #tpu.dot_dimension_numbers<[1], [0], [0], [1], [0, 0, 1, 1], [], []>} : vector<8x8xf32>, vector<8x32xf32>, vector<8x32xf32> -> vector<8x32xf32>
    %190 = arith.addf %172, %189 : vector<8x32xf32>
    %191 = vector.extract_strided_slice %168 {offsets = [0, 8], sizes = [8, 8], strides = [1, 1]} : vector<8x32xf32> to vector<8x8xf32>
    %192 = vector.extract_strided_slice %171 {offsets = [0, 8], sizes = [8, 8], strides = [1, 1]} : vector<8x32xf32> to vector<8x8xf32>
    %cst_74 = arith.constant dense<0.000000e+00> : vector<8x8xf32>
    %193 = tpu.matmul %191, %192, %cst_74 {dimension_numbers = #tpu.dot_dimension_numbers<[1], [1], [0], [0], [0, 0, 1, 0], [], []>} : vector<8x8xf32>, vector<8x8xf32>, vector<8x8xf32> -> vector<8x8xf32>
    %cst_75 = arith.constant -1.000000e+30 : f32
    %194 = vector.broadcast %cst_75 : f32 to vector<8x8xf32>
    %195 = arith.select %5, %193, %194 : vector<8x8xi1>, vector<8x8xf32>
    %cst_76 = arith.constant dense<0xFF800000> : vector<8xf32>
    %196 = vector.multi_reduction <maximumf>, %195, %cst_76 [1] : vector<8x8xf32> to vector<8xf32>
    %197 = vector.shape_cast %196 : vector<8xf32> to vector<8x1xf32>
    %198 = vector.broadcast %197 : vector<8x1xf32> to vector<8x8xf32>
    %199 = arith.subf %195, %198 : vector<8x8xf32>
    %200 = math.exp %199 : vector<8x8xf32>
    %cst_77 = arith.constant dense<0.000000e+00> : vector<8xf32>
    %201 = vector.multi_reduction <add>, %200, %cst_77 [1] : vector<8x8xf32> to vector<8xf32>
    %202 = vector.shape_cast %201 : vector<8xf32> to vector<8x1xf32>
    %203 = tpu.reciprocal %202 {approx = true} : vector<8x1xf32> -> vector<8x1xf32>
    %204 = vector.broadcast %203 : vector<8x1xf32> to vector<8x8xf32>
    %205 = arith.mulf %200, %204 : vector<8x8xf32>
    %206 = vector.extract_strided_slice %165 {offsets = [0, 32], sizes = [8, 32], strides = [1, 1]} : vector<8x128xf32> to vector<8x32xf32>
    %cst_78 = arith.constant dense<0.000000e+00> : vector<8x32xf32>
    %207 = tpu.matmul %205, %206, %cst_78 {dimension_numbers = #tpu.dot_dimension_numbers<[1], [0], [0], [1], [0, 0, 1, 1], [], []>} : vector<8x8xf32>, vector<8x32xf32>, vector<8x32xf32> -> vector<8x32xf32>
    %208 = arith.addf %190, %207 : vector<8x32xf32>
    %209 = vector.extract_strided_slice %168 {offsets = [0, 16], sizes = [8, 8], strides = [1, 1]} : vector<8x32xf32> to vector<8x8xf32>
    %210 = vector.extract_strided_slice %171 {offsets = [0, 16], sizes = [8, 8], strides = [1, 1]} : vector<8x32xf32> to vector<8x8xf32>
    %cst_79 = arith.constant dense<0.000000e+00> : vector<8x8xf32>
    %211 = tpu.matmul %209, %210, %cst_79 {dimension_numbers = #tpu.dot_dimension_numbers<[1], [1], [0], [0], [0, 0, 1, 0], [], []>} : vector<8x8xf32>, vector<8x8xf32>, vector<8x8xf32> -> vector<8x8xf32>
    %cst_80 = arith.constant -1.000000e+30 : f32
    %212 = vector.broadcast %cst_80 : f32 to vector<8x8xf32>
    %213 = arith.select %5, %211, %212 : vector<8x8xi1>, vector<8x8xf32>
    %cst_81 = arith.constant dense<0xFF800000> : vector<8xf32>
    %214 = vector.multi_reduction <maximumf>, %213, %cst_81 [1] : vector<8x8xf32> to vector<8xf32>
    %215 = vector.shape_cast %214 : vector<8xf32> to vector<8x1xf32>
    %216 = vector.broadcast %215 : vector<8x1xf32> to vector<8x8xf32>
    %217 = arith.subf %213, %216 : vector<8x8xf32>
    %218 = math.exp %217 : vector<8x8xf32>
    %cst_82 = arith.constant dense<0.000000e+00> : vector<8xf32>
    %219 = vector.multi_reduction <add>, %218, %cst_82 [1] : vector<8x8xf32> to vector<8xf32>
    %220 = vector.shape_cast %219 : vector<8xf32> to vector<8x1xf32>
    %221 = tpu.reciprocal %220 {approx = true} : vector<8x1xf32> -> vector<8x1xf32>
    %222 = vector.broadcast %221 : vector<8x1xf32> to vector<8x8xf32>
    %223 = arith.mulf %218, %222 : vector<8x8xf32>
    %224 = vector.extract_strided_slice %165 {offsets = [0, 64], sizes = [8, 32], strides = [1, 1]} : vector<8x128xf32> to vector<8x32xf32>
    %cst_83 = arith.constant dense<0.000000e+00> : vector<8x32xf32>
    %225 = tpu.matmul %223, %224, %cst_83 {dimension_numbers = #tpu.dot_dimension_numbers<[1], [0], [0], [1], [0, 0, 1, 1], [], []>} : vector<8x8xf32>, vector<8x32xf32>, vector<8x32xf32> -> vector<8x32xf32>
    %226 = arith.addf %208, %225 : vector<8x32xf32>
    %227 = vector.extract_strided_slice %168 {offsets = [0, 24], sizes = [8, 8], strides = [1, 1]} : vector<8x32xf32> to vector<8x8xf32>
    %228 = vector.extract_strided_slice %171 {offsets = [0, 24], sizes = [8, 8], strides = [1, 1]} : vector<8x32xf32> to vector<8x8xf32>
    %cst_84 = arith.constant dense<0.000000e+00> : vector<8x8xf32>
    %229 = tpu.matmul %227, %228, %cst_84 {dimension_numbers = #tpu.dot_dimension_numbers<[1], [1], [0], [0], [0, 0, 1, 0], [], []>} : vector<8x8xf32>, vector<8x8xf32>, vector<8x8xf32> -> vector<8x8xf32>
    %cst_85 = arith.constant -1.000000e+30 : f32
    %230 = vector.broadcast %cst_85 : f32 to vector<8x8xf32>
    %231 = arith.select %5, %229, %230 : vector<8x8xi1>, vector<8x8xf32>
    %cst_86 = arith.constant dense<0xFF800000> : vector<8xf32>
    %232 = vector.multi_reduction <maximumf>, %231, %cst_86 [1] : vector<8x8xf32> to vector<8xf32>
    %233 = vector.shape_cast %232 : vector<8xf32> to vector<8x1xf32>
    %234 = vector.broadcast %233 : vector<8x1xf32> to vector<8x8xf32>
    %235 = arith.subf %231, %234 : vector<8x8xf32>
    %236 = math.exp %235 : vector<8x8xf32>
    %cst_87 = arith.constant dense<0.000000e+00> : vector<8xf32>
    %237 = vector.multi_reduction <add>, %236, %cst_87 [1] : vector<8x8xf32> to vector<8xf32>
    %238 = vector.shape_cast %237 : vector<8xf32> to vector<8x1xf32>
    %239 = tpu.reciprocal %238 {approx = true} : vector<8x1xf32> -> vector<8x1xf32>
    %240 = vector.broadcast %239 : vector<8x1xf32> to vector<8x8xf32>
    %241 = arith.mulf %236, %240 : vector<8x8xf32>
    %242 = vector.extract_strided_slice %165 {offsets = [0, 96], sizes = [8, 32], strides = [1, 1]} : vector<8x128xf32> to vector<8x32xf32>
    %cst_88 = arith.constant dense<0.000000e+00> : vector<8x32xf32>
    %243 = tpu.matmul %241, %242, %cst_88 {dimension_numbers = #tpu.dot_dimension_numbers<[1], [0], [0], [1], [0, 0, 1, 1], [], []>} : vector<8x8xf32>, vector<8x32xf32>, vector<8x32xf32> -> vector<8x32xf32>
    %244 = arith.addf %226, %243 : vector<8x32xf32>
    %245 = arith.addf %137, %244 : vector<8x32xf32>
    %246 = arith.mulf %245, %245 : vector<8x32xf32>
    %cst_89 = arith.constant dense<0.000000e+00> : vector<8xf32>
    %247 = vector.multi_reduction <add>, %246, %cst_89 [1] : vector<8x32xf32> to vector<8xf32>
    %248 = vector.shape_cast %247 : vector<8xf32> to vector<8x1xf32>
    %cst_90 = arith.constant 3.200000e+01 : f32
    %249 = vector.broadcast %cst_90 : f32 to vector<8x1xf32>
    %250 = arith.divf %248, %249 : vector<8x1xf32>
    %cst_91 = arith.constant 9.99999997E-7 : f32
    %251 = vector.broadcast %cst_91 : f32 to vector<8x1xf32>
    %252 = arith.addf %250, %251 : vector<8x1xf32>
    %253 = math.rsqrt %252 : vector<8x1xf32>
    %254 = vector.broadcast %253 : vector<8x1xf32> to vector<8x32xf32>
    %255 = arith.mulf %245, %254 : vector<8x32xf32>
    %256 = vector.broadcast %143 : vector<1x32xf32> to vector<8x32xf32>
    %257 = arith.mulf %255, %256 : vector<8x32xf32>
    %cst_92 = arith.constant dense<0.000000e+00> : vector<8x128xf32>
    %258 = tpu.matmul %257, %145, %cst_92 {dimension_numbers = #tpu.dot_dimension_numbers<[1], [0], [0], [1], [0, 0, 1, 1], [], []>} : vector<8x32xf32>, vector<32x128xf32>, vector<8x128xf32> -> vector<8x128xf32>
    %259 = vector.extract_strided_slice %258 {offsets = [0, 0], sizes = [8, 64], strides = [1, 1]} : vector<8x128xf32> to vector<8x64xf32>
    %260 = vector.extract_strided_slice %258 {offsets = [0, 64], sizes = [8, 64], strides = [1, 1]} : vector<8x128xf32> to vector<8x64xf32>
    %261 = arith.negf %259 : vector<8x64xf32>
    %262 = math.exp %261 : vector<8x64xf32>
    %cst_93 = arith.constant 1.000000e+00 : f32
    %263 = vector.broadcast %cst_93 : f32 to vector<8x64xf32>
    %264 = arith.addf %263, %262 : vector<8x64xf32>
    %265 = arith.divf %263, %264 : vector<8x64xf32>
    %266 = arith.mulf %259, %265 : vector<8x64xf32>
    %267 = arith.mulf %266, %260 : vector<8x64xf32>
    %cst_94 = arith.constant dense<0.000000e+00> : vector<8x32xf32>
    %268 = tpu.matmul %267, %147, %cst_94 {dimension_numbers = #tpu.dot_dimension_numbers<[1], [0], [0], [1], [0, 0, 1, 1], [], []>} : vector<8x64xf32>, vector<64x32xf32>, vector<8x32xf32> -> vector<8x32xf32>
    %269 = arith.addf %245, %268 : vector<8x32xf32>
    %c0_95 = arith.constant 0 : index
    %c0_96 = arith.constant 0 : index
    %270 = vector.load %arg9[%c0_95, %c0_96] : memref<8x32xf32, #tpu.memory_space<vmem>>, vector<8x32xf32>
    tpu.vector_store %arg9[%c0_95, %c0_96], %269 {strides = array<i32>} : memref<8x32xf32, #tpu.memory_space<vmem>>, vector<8x32xf32>,
    return
  }
  func.func @transform_0(%arg0: i32) -> (i32, i32) {
    %c0_i32 = arith.constant 0 : i32
    %c0_i32_0 = arith.constant 0 : i32
    return %arg0, %c0_i32 : i32, i32
  }
  func.func @transform_1(%arg0: i32) -> (i32, i32) {
    %c0_i32 = arith.constant 0 : i32
    %c0_i32_0 = arith.constant 0 : i32
    %c0_i32_1 = arith.constant 0 : i32
    return %c0_i32, %c0_i32_0 : i32, i32
  }
  func.func @transform_2(%arg0: i32) -> (i32, i32) {
    %c0_i32 = arith.constant 0 : i32
    %c0_i32_0 = arith.constant 0 : i32
    %c0_i32_1 = arith.constant 0 : i32
    return %c0_i32, %c0_i32_0 : i32, i32
  }
  func.func @transform_3(%arg0: i32) -> (i32, i32, i32) {
    %c0_i32 = arith.constant 0 : i32
    %c0_i32_0 = arith.constant 0 : i32
    %c0_i32_1 = arith.constant 0 : i32
    %c0_i32_2 = arith.constant 0 : i32
    return %c0_i32, %c0_i32_0, %c0_i32_1 : i32, i32, i32
  }
  func.func @transform_4(%arg0: i32) -> (i32, i32, i32) {
    %c0_i32 = arith.constant 0 : i32
    %c0_i32_0 = arith.constant 0 : i32
    %c0_i32_1 = arith.constant 0 : i32
    %c0_i32_2 = arith.constant 0 : i32
    return %c0_i32, %c0_i32_0, %c0_i32_1 : i32, i32, i32
  }
  func.func @transform_5(%arg0: i32) -> (i32, i32, i32) {
    %c0_i32 = arith.constant 0 : i32
    %c0_i32_0 = arith.constant 0 : i32
    %c0_i32_1 = arith.constant 0 : i32
    %c0_i32_2 = arith.constant 0 : i32
    return %c0_i32, %c0_i32_0, %c0_i32_1 : i32, i32, i32
  }
  func.func @transform_6(%arg0: i32) -> (i32, i32, i32) {
    %c0_i32 = arith.constant 0 : i32
    %c0_i32_0 = arith.constant 0 : i32
    %c0_i32_1 = arith.constant 0 : i32
    %c0_i32_2 = arith.constant 0 : i32
    return %c0_i32, %c0_i32_0, %c0_i32_1 : i32, i32, i32
  }
  func.func @transform_7(%arg0: i32) -> (i32, i32, i32) {
    %c0_i32 = arith.constant 0 : i32
    %c0_i32_0 = arith.constant 0 : i32
    %c0_i32_1 = arith.constant 0 : i32
    %c0_i32_2 = arith.constant 0 : i32
    return %c0_i32, %c0_i32_0, %c0_i32_1 : i32, i32, i32
  }
  func.func @transform_8(%arg0: i32) -> (i32, i32) {
    %c0_i32 = arith.constant 0 : i32
    %c0_i32_0 = arith.constant 0 : i32
    return %arg0, %c0_i32 : i32, i32
  }
}

</mosaic_0001>

<llo_original>
// kernel: tile.19
$region0: #{tile.19}
  %s0 = inlined_call_operand.vmem [shape: f32[8,4,8], index: 0, kind: input, shape index: {}]
  %s1 = inlined_call_operand.vmem [shape: f32[8,32], index: 1, kind: output, shape index: {}]
  $region1: #{tile.19} parent=0
    #allocation0 [shape = 'u8[32768]{0}', space=vmem, size = 0x8000, scoped, tag = 'scoped mem for input reshape']
    %s3 = ssub.s32 16, 1
    %s4 = scalar_lea.vmem %s0, 28
    %v5 = vld [vmem:[%s4] sm:%s3]
    %s6 = scalar_lea.vmem [#allocation0], 56
    %7 = vst [vmem:[%s6] sm:%s3] %v5
    %s8 = scalar_lea.vmem %s0, 24
    %v9 = vld [vmem:[%s8] sm:%s3]
    %s10 = scalar_lea.vmem [#allocation0], 48
    %11 = vst [vmem:[%s10] sm:%s3] %v9
    %s12 = scalar_lea.vmem %s0, 20
    %v13 = vld [vmem:[%s12] sm:%s3]
    %s14 = scalar_lea.vmem [#allocation0], 40
    %15 = vst [vmem:[%s14] sm:%s3] %v13
    %s16 = scalar_lea.vmem %s0, 16
    %v17 = vld [vmem:[%s16] sm:%s3]
    %s18 = scalar_lea.vmem [#allocation0], 32
    %19 = vst [vmem:[%s18] sm:%s3] %v17
    %s20 = scalar_lea.vmem %s0, 12
    %v21 = vld [vmem:[%s20] sm:%s3]
    %s22 = scalar_lea.vmem [#allocation0], 24
    %23 = vst [vmem:[%s22] sm:%s3] %v21
    %s24 = scalar_lea.vmem %s0, 8
    %v25 = vld [vmem:[%s24] sm:%s3]
    %s26 = scalar_lea.vmem [#allocation0], 16
    %27 = vst [vmem:[%s26] sm:%s3] %v25
    %s28 = scalar_lea.vmem %s0, 4
    %v29 = vld [vmem:[%s28] sm:%s3]
    %s30 = scalar_lea.vmem [#allocation0], 8
    %31 = vst [vmem:[%s30] sm:%s3] %v29
    %v32 = vld [vmem:[%s0] sm:%s3]
    %33 = vst [vmem:[#allocation0] sm:%s3] %v32
    %v34 = vld [vmem:[#allocation0] ss:$8 sm:$0xf]
    %v35 = vld [vmem:[#allocation0] ss:$8 sm:$0xf0]
    %vm36 = vcmask 1047556
    %v37 = vsel %vm36, %v35, %v34
    %vm38 = vcmask 64512
    %39 = vst.msk [vmem:[%s1] sm:$0xff] %vm38, %v37
    %s40 = scalar_lea.vmem [#allocation0], 3
    %v41 = vld [vmem:[%s40] ss:$8 sm:$0xf]
    %s42 = scalar_lea.vmem [#allocation0], 3
    %v43 = vld [vmem:[%s42] ss:$8 sm:$0xf0]
    %vm44 = vcmask 1047556
    %v45 = vsel %vm44, %v43, %v41
    %46 = vrot.lane.b32.xlu0 %v45, 24
    %v47 = vpop.permute.xlu0 %46
    %vm48 = vcmask 261312
    %49 = vst.msk [vmem:[%s1] sm:$0xff] %vm48, %v47
    %s50 = scalar_lea.vmem [#allocation0], 2
    %v51 = vld [vmem:[%s50] ss:$8 sm:$0xf]
    %s52 = scalar_lea.vmem [#allocation0], 2
    %v53 = vld [vmem:[%s52] ss:$8 sm:$0xf0]
    %vm54 = vcmask 1047556
    %v55 = vsel %vm54, %v53, %v51
    %56 = vrot.lane.b32.xlu0 %v55, 16
    %v57 = vpop.permute.xlu0 %56
    %vm58 = vcmask 195712
    %59 = vst.msk [vmem:[%s1] sm:$0xff] %vm58, %v57
    %s60 = scalar_lea.vmem [#allocation0], 1
    %v61 = vld [vmem:[%s60] ss:$8 sm:$0xf]
    %s62 = scalar_lea.vmem [#allocation0], 1
    %v63 = vld [vmem:[%s62] ss:$8 sm:$0xf0]
    %vm64 = vcmask 1047556
    %v65 = vsel %vm64, %v63, %v61
    %66 = vrot.lane.b32.xlu0 %v65, 8
    %v67 = vpop.permute.xlu0 %66
    %vm68 = vcmask 130112
    %69 = vst.msk [vmem:[%s1] sm:$0xff] %vm68, %v67

// kernel: llama_first_half.1
$region0: #{llama_first_half.1}
  #allocation0 [shape = 'u32[]', space=smem, size = 0x4, offset = 0x4, fixed_abs, tag = 'smem constant byte address 0x4 - core index']
  #allocation1 [shape = 'u32[72,128]{1,0:T(1,128)}', space=vmem, size = 0x9000, scoped, tag = 'internal scratch']
  %s0 = inlined_call_operand.vmem [shape: f32[16,32], index: 0, kind: input, shape index: {}]
  %s1 = inlined_call_operand.vmem [shape: f32[8,32], index: 1, kind: input, shape index: {}]
  %s2 = inlined_call_operand.vmem [shape: f32[8,32], index: 2, kind: input, shape index: {}]
  %s3 = inlined_call_operand.vmem [shape: f32[2,1,32], index: 3, kind: input, shape index: {}]
  %s4 = inlined_call_operand.vmem [shape: f32[2,32,256], index: 4, kind: input, shape index: {}]
  %s5 = inlined_call_operand.vmem [shape: f32[2,1,32], index: 5, kind: input, shape index: {}]
  %s6 = inlined_call_operand.vmem [shape: f32[2,32,128], index: 6, kind: input, shape index: {}]
  %s7 = inlined_call_operand.vmem [shape: f32[2,64,32], index: 7, kind: input, shape index: {}]
  %s8 = inlined_call_operand.hbm [shape: f32[16,32], index: 8, kind: output, shape index: {}]
  %s9 = sld [smem:[#allocation0]]
  $region65: #{llama_first_half.1} parent=0
    _
  %s11 = ssub.s32 1, %s9
  %s12 = scalar_select 0, %s11, %s9
  $region1: #{llama_first_half.1} parent=0
    #allocation2 [shape = 'u8[8192]{0}', space=vmem, size = 0x2000, scoped, tag = 'output window, operand 0']
    #allocation3 [shape = 's32[2]{0}', space=sflag, size = 0x8, scoped, tag = 'scoped memory for llama_first_half.1']
    %13 = vsyncpa [#allocation3], 0
    %s14 = scalar_lea.sflag [#allocation3], 1
    %15 = vsyncpa %s14, 0
    loop: start=0, step=1, limit=4
    $region2: #{llama_first_half.1} parent=1 // loop_pre_header
      _
    $region3: #{llama_first_half.1} parent=1 // loop_header
      %s17 = sphi 0, %s21
      %p18 = scmp.ge.s32.totalorder %s17, 4
      %s27 = sphi 0, %s29
      %s30 = sphi 0, %s27
      %s31 = sphi 0, %s30
      %s47 = sphi 0, %s31
      %s51 = sphi 0, %s51
      %s53 = sphi 0, %s51
      %s54 = sphi 0, %s53
      %s68 = sphi 0, %s54
      %s72 = sphi 0, %s72
      %s74 = sphi 0, %s72
      %s75 = sphi 0, %s74
      %s89 = sphi 0, %s75
      %s93 = sphi 0, %s93
      %s95 = sphi 0, %s93
      %s96 = sphi 0, %s95
      %s110 = sphi 0, %s96
      %s114 = sphi 0, %s114
      %s116 = sphi 0, %s114
      %s117 = sphi 0, %s116
      %s131 = sphi 0, %s117
      %s135 = sphi 0, %s135
      %s137 = sphi 0, %s135
      %s138 = sphi 0, %s137
      %s152 = sphi 0, %s138
      %s156 = sphi 0, %s156
      %s158 = sphi 0, %s156
      %s159 = sphi 0, %s158
      %s173 = sphi 0, %s159
      %s177 = sphi 0, %s177
      %s179 = sphi 0, %s177
      %s180 = sphi 0, %s179
      %s194 = sphi 0, %s180
      %s200 = sphi 0, %s202
      %s203 = sphi 0, %s200
      %s204 = sphi 0, %s203
      %s220 = sphi 0, %s204
    $region4: #{llama_first_half.1} parent=1 // loop_header_branch
      %20 = sbr.rel (%p18) target = $region8
    $region5: #{llama_first_half.1} parent=1 // loop_body
      %s22 = ssub.s32 %s17, 1
      %s23 = ssub.s32 %s17, 2
      %s24 = sadd.s32 %s17, 1
      %s25 = ssub.s32 %s17, %s24
      %p26 = scmp.eq.s32.totalorder %s25, 0
      %s28 = sadd.s32 %s27, 1
      %s29 = scalar_select %p26, %s27, %s28
      %p32 = pneg %p26
      %p33 = scmp.eq.s32.totalorder %s17, 1
      %p34 = por %p32, %p33
      %p35 = scmp.ne.s32.totalorder %s27, %s30
      %p36 = scmp.eq.s32.totalorder %s17, 0
      %p37 = por %p35, %p36
      %p38 = scmp.ne.s32.totalorder %s27, %s30
      %p39 = scmp.eq.s32.totalorder %s22, 1
      %p40 = por %p38, %p39
      %p41 = scmp.ne.s32.totalorder %s30, %s31
      %p42 = scmp.eq.s32.totalorder %s22, 0
      %p43 = por %p41, %p42
      %p44 = scmp.ne.s32.totalorder %s30, %s31
      %p45 = scmp.eq.s32.totalorder %s23, 1
      %p46 = por %p44, %p45
      %p48 = scmp.ne.s32.totalorder %s31, %s47
      %p49 = scmp.eq.s32.totalorder %s23, 0
      %p50 = por %p48, %p49
      %s52 = sadd.s32 %s51, 1
      %p55 = scmp.eq.s32.totalorder %s17, 1
      %p56 = scmp.ne.s32.totalorder %s51, %s53
      %p57 = scmp.eq.s32.totalorder %s17, 0
      %p58 = por %p56, %p57
      %p59 = scmp.ne.s32.totalorder %s51, %s53
      %p60 = scmp.eq.s32.totalorder %s22, 1
      %p61 = por %p59, %p60
      %p62 = scmp.ne.s32.totalorder %s53, %s54
      %p63 = scmp.eq.s32.totalorder %s22, 0
      %p64 = por %p62, %p63
      %p65 = scmp.ne.s32.totalorder %s53, %s54
      %p66 = scmp.eq.s32.totalorder %s23, 1
      %p67 = por %p65, %p66
      %p69 = scmp.ne.s32.totalorder %s54, %s68
      %p70 = scmp.eq.s32.totalorder %s23, 0
      %p71 = por %p69, %p70
      %s73 = sadd.s32 %s72, 1
      %p76 = scmp.eq.s32.totalorder %s17, 1
      %p77 = scmp.ne.s32.totalorder %s72, %s74
      %p78 = scmp.eq.s32.totalorder %s17, 0
      %p79 = por %p77, %p78
      %p80 = scmp.ne.s32.totalorder %s72, %s74
      %p81 = scmp.eq.s32.totalorder %s22, 1
      %p82 = por %p80, %p81
      %p83 = scmp.ne.s32.totalorder %s74, %s75
      %p84 = scmp.eq.s32.totalorder %s22, 0
      %p85 = por %p83, %p84
      %p86 = scmp.ne.s32.totalorder %s74, %s75
      %p87 = scmp.eq.s32.totalorder %s23, 1
      %p88 = por %p86, %p87
      %p90 = scmp.ne.s32.totalorder %s75, %s89
      %p91 = scmp.eq.s32.totalorder %s23, 0
      %p92 = por %p90, %p91
      %s94 = sadd.s32 %s93, 1
      %p97 = scmp.eq.s32.totalorder %s17, 1
      %p98 = scmp.ne.s32.totalorder %s93, %s95
      %p99 = scmp.eq.s32.totalorder %s17, 0
      %p100 = por %p98, %p99
      %p101 = scmp.ne.s32.totalorder %s93, %s95
      %p102 = scmp.eq.s32.totalorder %s22, 1
      %p103 = por %p101, %p102
      %p104 = scmp.ne.s32.totalorder %s95, %s96
      %p105 = scmp.eq.s32.totalorder %s22, 0
      %p106 = por %p104, %p105
      %p107 = scmp.ne.s32.totalorder %s95, %s96
      %p108 = scmp.eq.s32.totalorder %s23, 1
      %p109 = por %p107, %p108
      %p111 = scmp.ne.s32.totalorder %s96, %s110
      %p112 = scmp.eq.s32.totalorder %s23, 0
      %p113 = por %p111, %p112
      %s115 = sadd.s32 %s114, 1
      %p118 = scmp.eq.s32.totalorder %s17, 1
      %p119 = scmp.ne.s32.totalorder %s114, %s116
      %p120 = scmp.eq.s32.totalorder %s17, 0
      %p121 = por %p119, %p120
      %p122 = scmp.ne.s32.totalorder %s114, %s116
      %p123 = scmp.eq.s32.totalorder %s22, 1
      %p124 = por %p122, %p123
      %p125 = scmp.ne.s32.totalorder %s116, %s117
      %p126 = scmp.eq.s32.totalorder %s22, 0
      %p127 = por %p125, %p126
      %p128 = scmp.ne.s32.totalorder %s116, %s117
      %p129 = scmp.eq.s32.totalorder %s23, 1
      %p130 = por %p128, %p129
      %p132 = scmp.ne.s32.totalorder %s117, %s131
      %p133 = scmp.eq.s32.totalorder %s23, 0
      %p134 = por %p132, %p133
      %s136 = sadd.s32 %s135, 1
      %p139 = scmp.eq.s32.totalorder %s17, 1
      %p140 = scmp.ne.s32.totalorder %s135, %s137
      %p141 = scmp.eq.s32.totalorder %s17, 0
      %p142 = por %p140, %p141
      %p143 = scmp.ne.s32.totalorder %s135, %s137
      %p144 = scmp.eq.s32.totalorder %s22, 1
      %p145 = por %p143, %p144
      %p146 = scmp.ne.s32.totalorder %s137, %s138
      %p147 = scmp.eq.s32.totalorder %s22, 0
      %p148 = por %p146, %p147
      %p149 = scmp.ne.s32.totalorder %s137, %s138
      %p150 = scmp.eq.s32.totalorder %s23, 1
      %p151 = por %p149, %p150
      %p153 = scmp.ne.s32.totalorder %s138, %s152
      %p154 = scmp.eq.s32.totalorder %s23, 0
      %p155 = por %p153, %p154
      %s157 = sadd.s32 %s156, 1
      %p160 = scmp.eq.s32.totalorder %s17, 1
      %p161 = scmp.ne.s32.totalorder %s156, %s158
      %p162 = scmp.eq.s32.totalorder %s17, 0
      %p163 = por %p161, %p162
      %p164 = scmp.ne.s32.totalorder %s156, %s158
      %p165 = scmp.eq.s32.totalorder %s22, 1
      %p166 = por %p164, %p165
      %p167 = scmp.ne.s32.totalorder %s158, %s159
      %p168 = scmp.eq.s32.totalorder %s22, 0
      %p169 = por %p167, %p168
      %p170 = scmp.ne.s32.totalorder %s158, %s159
      %p171 = scmp.eq.s32.totalorder %s23, 1
      %p172 = por %p170, %p171
      %p174 = scmp.ne.s32.totalorder %s159, %s173
      %p175 = scmp.eq.s32.totalorder %s23, 0
      %p176 = por %p174, %p175
      %s178 = sadd.s32 %s177, 1
      %p181 = scmp.eq.s32.totalorder %s17, 1
      %p182 = scmp.ne.s32.totalorder %s177, %s179
      %p183 = scmp.eq.s32.totalorder %s17, 0
      %p184 = por %p182, %p183
      %p185 = scmp.ne.s32.totalorder %s177, %s179
      %p186 = scmp.eq.s32.totalorder %s22, 1
      %p187 = por %p185, %p186
      %p188 = scmp.ne.s32.totalorder %s179, %s180
      %p189 = scmp.eq.s32.totalorder %s22, 0
      %p190 = por %p188, %p189
      %p191 = scmp.ne.s32.totalorder %s179, %s180
      %p192 = scmp.eq.s32.totalorder %s23, 1
      %p193 = por %p191, %p192
      %p195 = scmp.ne.s32.totalorder %s180, %s194
      %p196 = scmp.eq.s32.totalorder %s23, 0
      %p197 = por %p195, %p196
      %s198 = ssub.s32 %s17, %s24
      %p199 = scmp.eq.s32.totalorder %s198, 0
      %s201 = sadd.s32 %s200, 1
      %s202 = scalar_select %p199, %s200, %s201
      %p205 = pneg %p199
      %p206 = scmp.eq.s32.totalorder %s17, 1
      %p207 = por %p205, %p206
      %p208 = scmp.ne.s32.totalorder %s200, %s203
      %p209 = scmp.eq.s32.totalorder %s17, 0
      %p210 = por %p208, %p209
      %p211 = scmp.ne.s32.totalorder %s200, %s203
      %p212 = scmp.eq.s32.totalorder %s22, 1
      %p213 = por %p211, %p212
      %p214 = scmp.ne.s32.totalorder %s203, %s204
      %p215 = scmp.eq.s32.totalorder %s22, 0
      %p216 = por %p214, %p215
      %p217 = scmp.ne.s32.totalorder %s203, %s204
      %p218 = scmp.eq.s32.totalorder %s23, 1
      %p219 = por %p217, %p218
      %p221 = scmp.ne.s32.totalorder %s204, %s220
      %p222 = scmp.eq.s32.totalorder %s23, 0
      %p223 = por %p221, %p222
      %p224 = scmp.le.s32.totalorder 1, %s17
      %p225 = scmp.lt.s32.totalorder %s17, 3
      %p226 = pnand %p224, %p225
      %p227 = pneg %p226
      // Predicated region
      $region9: #{llama_first_half.1} parent=5 // pred_check
        _
      $region10: #{llama_first_half.1} parent=5 // pred_check_branch
        %229 = sbr.rel (%p226) target = $region12
      $region11: #{llama_first_half.1} parent=5 // pred_region
        %s230 = ssub.s32 %s17, 1
        // Predicated region
        $region13: #{llama_first_half.1} parent=11 // pred_check
          %p231 = pneg %p64
        $region14: #{llama_first_half.1} parent=11 // pred_check_branch
          %233 = sbr.rel (%p231) target = $region16
        $region15: #{llama_first_half.1} parent=11 // pred_region
          _
        $region16: #{llama_first_half.1} parent=11 // pred_fallthru
          _
        // Predicated region
        $region17: #{llama_first_half.1} parent=11 // pred_check
          %p234 = pneg %p85
        $region18: #{llama_first_half.1} parent=11 // pred_check_branch
          %236 = sbr.rel (%p234) target = $region20
        $region19: #{llama_first_half.1} parent=11 // pred_region
          _
        $region20: #{llama_first_half.1} parent=11 // pred_fallthru
          _
        // Predicated region
        $region21: #{llama_first_half.1} parent=11 // pred_check
          %p237 = pneg %p106
        $region22: #{llama_first_half.1} parent=11 // pred_check_branch
          %239 = sbr.rel (%p237) target = $region24
        $region23: #{llama_first_half.1} parent=11 // pred_region
          _
        $region24: #{llama_first_half.1} parent=11 // pred_fallthru
          _
        // Predicated region
        $region25: #{llama_first_half.1} parent=11 // pred_check
          %p240 = pneg %p127
        $region26: #{llama_first_half.1} parent=11 // pred_check_branch
          %242 = sbr.rel (%p240) target = $region28
        $region27: #{llama_first_half.1} parent=11 // pred_region
          _
        $region28: #{llama_first_half.1} parent=11 // pred_fallthru
          _
        // Predicated region
        $region29: #{llama_first_half.1} parent=11 // pred_check
          %p243 = pneg %p148
        $region30: #{llama_first_half.1} parent=11 // pred_check_branch
          %245 = sbr.rel (%p243) target = $region32
        $region31: #{llama_first_half.1} parent=11 // pred_region
          _
        $region32: #{llama_first_half.1} parent=11 // pred_fallthru
          _
        // Predicated region
        $region33: #{llama_first_half.1} parent=11 // pred_check
          %p246 = pneg %p169
        $region34: #{llama_first_half.1} parent=11 // pred_check_branch
          %248 = sbr.rel (%p246) target = $region36
        $region35: #{llama_first_half.1} parent=11 // pred_region
          _
        $region36: #{llama_first_half.1} parent=11 // pred_fallthru
          _
        // Predicated region
        $region37: #{llama_first_half.1} parent=11 // pred_check
          %p249 = pneg %p190
        $region38: #{llama_first_half.1} parent=11 // pred_check_branch
          %251 = sbr.rel (%p249) target = $region40
        $region39: #{llama_first_half.1} parent=11 // pred_region
          _
        $region40: #{llama_first_half.1} parent=11 // pred_fallthru
          _
      $region12: #{llama_first_half.1} parent=5 // pred_fallthru
        _
      %p252 = scmp.lt.s32.totalorder %s17, 2
      // Predicated region
      $region41: #{llama_first_half.1} parent=5 // pred_check
        %p253 = pneg %p252
      $region42: #{llama_first_half.1} parent=5 // pred_check_branch
        %255 = sbr.rel (%p253) target = $region44
      $region43: #{llama_first_half.1} parent=5 // pred_region
        // Predicated region
        $region45: #{llama_first_half.1} parent=43 // pred_check
          %p256 = pneg %p37
        $region46: #{llama_first_half.1} parent=43 // pred_check_branch
          %258 = sbr.rel (%p256) target = $region48
        $region47: #{llama_first_half.1} parent=43 // pred_region
          %p259 = scmp.lt.s32.totalorder %s17, 1
          %s260 = scalar_select %p259, %s17, 1
          %s261 = smul.addr %s260, 8
          %s262 = scalar_lea.vmem %s0, %s261
        $region48: #{llama_first_half.1} parent=43 // pred_fallthru
          _
      $region44: #{llama_first_half.1} parent=5 // pred_fallthru
        _
      %p263 = scmp.le.s32.totalorder 1, %s17
      %p264 = scmp.lt.s32.totalorder %s17, 3
      %p265 = pnand %p263, %p264
      %p266 = pneg %p265
      // Predicated region
      $region49: #{llama_first_half.1} parent=5 // pred_check
        _
      $region50: #{llama_first_half.1} parent=5 // pred_check_branch
        %268 = sbr.rel (%p265) target = $region52
      $region51: #{llama_first_half.1} parent=5 // pred_region
        %s269 = ssub.s32 %s17, 1
        %p270 = scmp.lt.s32.totalorder %s22, 1
        %s271 = scalar_select %p270, %s22, 1
        %s272 = smul.addr %s271, 8
        %s273 = scalar_lea.vmem %s0, %s272
        %p274 = pneg %p43
        %p275 = pneg %p40
        %p276 = pneg %p64
        %p277 = pneg %p61
        %p278 = pneg %p85
        %p279 = pneg %p82
        %p280 = pneg %p106
        %p281 = pneg %p103
        %p282 = pneg %p127
        %p283 = pneg %p124
        %p284 = pneg %p148
        %p285 = pneg %p145
        %p286 = pneg %p169
        %p287 = pneg %p166
        %p288 = pneg %p190
        %p289 = pneg %p187
        %p290 = pneg %p216
        %p291 = pneg %p213
        %s292 = sand.u32 %s203, 1
        %s293 = scalar_lea.sflag [#allocation3], %s292
        %s294 = sand.u32 %s203, 1
        %s295 = smul.addr %s294, 8
        %s296 = scalar_lea.vmem [#allocation2], %s295
        %p297 = scmp.lt.s32.totalorder %s22, 1
        %s298 = scalar_select %p297, %s22, 1
        %s299 = smul.addr %s298, 8
        %s300 = scalar_lea.vmem %s0, %s299
        %v301 = vld [vmem:[%s300] sm:$0xff]
        %v302 = vld [vmem:[%s1] sm:$0xff]
        %v303 = vld [vmem:[%s2] sm:$0xff]
        %v304 = vlaneseq
        %v305 = vshrl.u32 %v304, 7
        %v306 = vlaneseq
        %v307 = vand.u32 %v306, 127
        %vm308 = vcmp.le.s32.totalorder %v307, %v305
        %v309 = vld [vmem:[%s3] sm:$0x1]
        %v310 = vld [vmem:[%s4] sm:$0xff]
        %v311 = vld [vmem:[%s4 + $0x8] sm:$0xff]
        %v312 = vld [vmem:[%s4 + $0x10] sm:$0xff]
        %v313 = vld [vmem:[%s4 + $0x18] sm:$0xff]
        %v314 = vld [vmem:[%s4 + $0x20] sm:$0xff]
        %v315 = vld [vmem:[%s4 + $0x28] sm:$0xff]
        %v316 = vld [vmem:[%s4 + $0x30] sm:$0xff]
        %v317 = vld [vmem:[%s4 + $0x38] sm:$0xff]
        %v318 = vld [vmem:[%s5] sm:$0x1]
        %v319 = vld [vmem:[%s6] sm:$0xff]
        %v320 = vld [vmem:[%s6 + $0x8] sm:$0xff]
        %v321 = vld [vmem:[%s6 + $0x10] sm:$0xff]
        %v322 = vld [vmem:[%s6 + $0x18] sm:$0xff]
        %v323 = vld [vmem:[%s7] sm:$0xff]
        %v324 = vld [vmem:[%s7 + $0x8] sm:$0xff]
        %v325 = vld [vmem:[%s7 + $0x10] sm:$0xff]
        %v326 = vld [vmem:[%s7 + $0x18] sm:$0xff]
        %v327 = vld [vmem:[%s7 + $0x20] sm:$0xff]
        %v328 = vld [vmem:[%s7 + $0x28] sm:$0xff]
        %v329 = vld [vmem:[%s7 + $0x30] sm:$0xff]
        %v330 = vld [vmem:[%s7 + $0x38] sm:$0xff]
        %v331 = vmul.f32 %v301, %v301
        %vm332 = vcmask 261120
        %v333 = vsel %vm332, %v331, 0.0
        %334 = vadd.xlane.f32.xlu0 %v333
        %v335 = vpop.xlane.xlu0 %334
        %v336 = vrcp.pop 32.0
        %v337 = vmul.f32 32.0, %v336
        %v338 = vsub.f32 1.0, %v337
        %v339 = vmul.f32 %v336, %v338
        %v340 = vadd.f32 %v336, %v339
        %vm341 = vweird.f32 %v336
        %v342 = vsel %vm341, %v336, %v340
        %v343 = vmul.f32 %v335, %v342
        %v344 = vadd.f32 %v343, 1e-06
        %v345 = vrsqrt.pop %v344
        %v346 = vmul.f32 %v345, %v344
        %v347 = vmul.f32 %v346, %v345
        %v348 = vmul.f32 0.5, %v347
        %v349 = vsub.f32 1.5, %v348
        %v350 = vmul.f32 %v345, %v349
        %vm351 = vweird.f32 %v344
        %vm352 = vweird.f32 %v345
        %vm353 = vmor %vm351, %vm352
        %v354 = vsel %vm353, %v345, %v350
        %v355 = vmul.f32 %v301, %v354
        %v357 = vperm.slane %v309, 0
        %v359 = vmul.f32 %v355, %v357
        %v361 = vsel %vm332, %v359, 0
        %363 = vmatpush.msra.mxu0 0.0
        %364 = vmatpush.msra.mxu0 0.0
        %365 = vmatpush.msra.mxu0 0.0
        %366 = vmatpush.msra.mxu0 0.0
        %367 = vmatpush.msra.mxu0 0.0
        %368 = vmatpush.msra.mxu0 0.0
        %369 = vmatpush.msra.mxu0 0.0
        %370 = vmatpush.msra.mxu0 0.0
        %371 = vmatpush.msra.mxu0 0.0
        %372 = vmatpush.msra.mxu0 0.0
        %373 = vmatpush.msra.mxu0 0.0
        %374 = vmatpush.msra.mxu0 0.0
        %375 = vmatpush.msra.mxu0 %v316
        %376 = vmatpush.msra.mxu0 %v314
        %377 = vmatpush.msra.mxu0 %v312
        %378 = vmatpush.msra.mxu0 %v310
        %379 = vmatmul.f32.gmra.mxu0 %v361
        %v380 = vpop.f32.mrf.mxu0
        %v381 = vadd.f32 0.0, %v380
        %382 = vdwg.mxu0
        %383 = vmatpush.msra.mxu0 0.0
        %384 = vmatpush.msra.mxu0 0.0
        %385 = vmatpush.msra.mxu0 0.0
        %386 = vmatpush.msra.mxu0 0.0
        %387 = vmatpush.msra.mxu0 0.0
        %388 = vmatpush.msra.mxu0 0.0
        %389 = vmatpush.msra.mxu0 0.0
        %390 = vmatpush.msra.mxu0 0.0
        %391 = vmatpush.msra.mxu0 0.0
        %392 = vmatpush.msra.mxu0 0.0
        %393 = vmatpush.msra.mxu0 0.0
        %394 = vmatpush.msra.mxu0 0.0
        %395 = vmatpush.msra.mxu0 %v317
        %396 = vmatpush.msra.mxu0 %v315
        %397 = vmatpush.msra.mxu0 %v313
        %398 = vmatpush.msra.mxu0 %v311
        %399 = vmatmul.f32.gmra.mxu0 %v361
        %v400 = vpop.f32.mrf.mxu0
        %v401 = vadd.f32 0.0, %v400
        %402 = vdwg.mxu0
        %v403 = vmul.f32 %v381, %v302
        %405 = vrot.lane.b32.xlu0 %v303, 32
        %v406 = vpop.permute.xlu0 %405
        %v408 = vmul.f32 %v381, %v406
        %410 = vrot.lane.b32.xlu0 %v408, 96
        %v411 = vpop.permute.xlu0 %410
        %v413 = vadd.f32 %v403, %v411
        %415 = vrot.lane.b32.xlu0 %v302, 64
        %v416 = vpop.permute.xlu0 %415
        %v418 = vmul.f32 %v381, %v416
        %419 = vrot.lane.b32.xlu0 %v303, 96
        %v420 = vpop.permute.xlu0 %419
        %v422 = vmul.f32 %v381, %v420
        %424 = vrot.lane.b32.xlu0 %v422, 96
        %v425 = vpop.permute.xlu0 %424
        %v427 = vadd.f32 %v418, %v425
        %429 = vrot.lane.b32.xlu0 %v427, 64
        %v430 = vpop.permute.xlu0 %429
        %vm431 = vcmask 64512
        %v433 = vsel %vm431, %v413, 0
        %v435 = vsel %vm431, %v430, 0
        %437 = vmatpush.xpose.msra.mxu0 0.0
        %438 = vmatpush.xpose.msra.mxu0 0.0
        %439 = vmatpush.xpose.msra.mxu0 0.0
        %440 = vmatpush.xpose.msra.mxu0 0.0
        %441 = vmatpush.xpose.msra.mxu0 0.0
        %442 = vmatpush.xpose.msra.mxu0 0.0
        %443 = vmatpush.xpose.msra.mxu0 0.0
        %444 = vmatpush.xpose.msra.mxu0 0.0
        %445 = vmatpush.xpose.msra.mxu0 0.0
        %446 = vmatpush.xpose.msra.mxu0 0.0
        %447 = vmatpush.xpose.msra.mxu0 0.0
        %448 = vmatpush.xpose.msra.mxu0 0.0
        %449 = vmatpush.xpose.msra.mxu0 0.0
        %450 = vmatpush.xpose.msra.mxu0 0.0
        %451 = vmatpush.xpose.msra.mxu0 0.0
        %452 = vmatpush.xpose.msra.mxu0 %v435
        %453 = vmatmul.f32.gmra.mxu0 %v433
        %v454 = vpop.f32.mrf.mxu0
        %v455 = vadd.f32 0.0, %v454
        %456 = vdwg.mxu0
        %v457 = vsel %vm308, %v455, -1e+30
        %v458 = vsel %vm431, %v457, -inf
        %459 = vmax.xlane.f32.xlu0 %v458
        %v460 = vpop.xlane.xlu0 %459
        %v461 = vsub.f32 %v457, %v460
        %v462 = vmul.f32 %v461, 1.442695
        %v463 = vpow.pop %v462
        %v464 = vsel %vm431, %v463, 0.0
        %465 = vadd.xlane.f32.xlu0 %v464
        %v466 = vpop.xlane.xlu0 %465
        %v467 = vrcp.pop %v466
        %v468 = vmul.f32 %v463, %v467
        %469 = vrot.lane.b32.xlu0 %v413, 120
        %v470 = vpop.permute.xlu0 %469
        %471 = vrot.lane.b32.xlu0 %v427, 56
        %v472 = vpop.permute.xlu0 %471
        %v473 = vsel %vm431, %v470, 0
        %v475 = vsel %vm431, %v472, 0
        %477 = vmatpush.xpose.msra.mxu0 0.0
        %478 = vmatpush.xpose.msra.mxu0 0.0
        %479 = vmatpush.xpose.msra.mxu0 0.0
        %480 = vmatpush.xpose.msra.mxu0 0.0
        %481 = vmatpush.xpose.msra.mxu0 0.0
        %482 = vmatpush.xpose.msra.mxu0 0.0
        %483 = vmatpush.xpose.msra.mxu0 0.0
        %484 = vmatpush.xpose.msra.mxu0 0.0
        %485 = vmatpush.xpose.msra.mxu0 0.0
        %486 = vmatpush.xpose.msra.mxu0 0.0
        %487 = vmatpush.xpose.msra.mxu0 0.0
        %488 = vmatpush.xpose.msra.mxu0 0.0
        %489 = vmatpush.xpose.msra.mxu0 0.0
        %490 = vmatpush.xpose.msra.mxu0 0.0
        %491 = vmatpush.xpose.msra.mxu0 0.0
        %492 = vmatpush.xpose.msra.mxu0 %v475
        %493 = vmatmul.f32.gmra.mxu0 %v473
        %v494 = vpop.f32.mrf.mxu0
        %v495 = vadd.f32 0.0, %v494
        %496 = vdwg.mxu0
        %v497 = vsel %vm308, %v495, -1e+30
        %v498 = vsel %vm431, %v497, -inf
        %499 = vmax.xlane.f32.xlu0 %v498
        %v500 = vpop.xlane.xlu0 %499
        %v501 = vsub.f32 %v497, %v500
        %v502 = vmul.f32 %v501, 1.442695
        %v503 = vpow.pop %v502
        %v504 = vsel %vm431, %v503, 0.0
        %505 = vadd.xlane.f32.xlu0 %v504
        %v506 = vpop.xlane.xlu0 %505
        %v507 = vrcp.pop %v506
        %v508 = vmul.f32 %v503, %v507
        %510 = vrot.lane.b32.xlu0 %v401, 96
        %v511 = vpop.permute.xlu0 %510
        %v514 = vsel %vm431, %v508, 0
        %516 = vmatpush.msra.mxu0 0.0
        %517 = vmatpush.msra.mxu0 0.0
        %518 = vmatpush.msra.mxu0 0.0
        %519 = vmatpush.msra.mxu0 0.0
        %520 = vmatpush.msra.mxu0 0.0
        %521 = vmatpush.msra.mxu0 0.0
        %522 = vmatpush.msra.mxu0 0.0
        %523 = vmatpush.msra.mxu0 0.0
        %524 = vmatpush.msra.mxu0 0.0
        %525 = vmatpush.msra.mxu0 0.0
        %526 = vmatpush.msra.mxu0 0.0
        %527 = vmatpush.msra.mxu0 0.0
        %528 = vmatpush.msra.mxu0 0.0
        %529 = vmatpush.msra.mxu0 0.0
        %530 = vmatpush.msra.mxu0 0.0
        %531 = vmatpush.msra.mxu0 %v511
        %532 = vmatmul.f32.gmra.mxu0 %v514
        %v533 = vpop.f32.mrf.mxu0
        %v534 = vadd.f32 0.0, %v533
        %535 = vdwg.mxu0
        %v537 = vsel %vm431, %v468, 0
        %539 = vmatpush.msra.mxu0 0.0
        %540 = vmatpush.msra.mxu0 0.0
        %541 = vmatpush.msra.mxu0 0.0
        %542 = vmatpush.msra.mxu0 0.0
        %543 = vmatpush.msra.mxu0 0.0
        %544 = vmatpush.msra.mxu0 0.0
        %545 = vmatpush.msra.mxu0 0.0
        %546 = vmatpush.msra.mxu0 0.0
        %547 = vmatpush.msra.mxu0 0.0
        %548 = vmatpush.msra.mxu0 0.0
        %549 = vmatpush.msra.mxu0 0.0
        %550 = vmatpush.msra.mxu0 0.0
        %551 = vmatpush.msra.mxu0 0.0
        %552 = vmatpush.msra.mxu0 0.0
        %553 = vmatpush.msra.mxu0 0.0
        %554 = vmatpush.msra.mxu0 %v401
        %555 = vmatmul.f32.gmra.mxu0 %v537
        %v556 = vpop.f32.mrf.mxu0
        %v557 = vadd.f32 %v534, %v556
        %558 = vdwg.mxu0
        %559 = vrot.lane.b32.xlu0 %v413, 112
        %v560 = vpop.permute.xlu0 %559
        %561 = vrot.lane.b32.xlu0 %v427, 48
        %v562 = vpop.permute.xlu0 %561
        %v563 = vsel %vm431, %v560, 0
        %v565 = vsel %vm431, %v562, 0
        %567 = vmatpush.xpose.msra.mxu0 0.0
        %568 = vmatpush.xpose.msra.mxu0 0.0
        %569 = vmatpush.xpose.msra.mxu0 0.0
        %570 = vmatpush.xpose.msra.mxu0 0.0
        %571 = vmatpush.xpose.msra.mxu0 0.0
        %572 = vmatpush.xpose.msra.mxu0 0.0
        %573 = vmatpush.xpose.msra.mxu0 0.0
        %574 = vmatpush.xpose.msra.mxu0 0.0
        %575 = vmatpush.xpose.msra.mxu0 0.0
        %576 = vmatpush.xpose.msra.mxu0 0.0
        %577 = vmatpush.xpose.msra.mxu0 0.0
        %578 = vmatpush.xpose.msra.mxu0 0.0
        %579 = vmatpush.xpose.msra.mxu0 0.0
        %580 = vmatpush.xpose.msra.mxu0 0.0
        %581 = vmatpush.xpose.msra.mxu0 0.0
        %582 = vmatpush.xpose.msra.mxu0 %v565
        %583 = vmatmul.f32.gmra.mxu0 %v563
        %v584 = vpop.f32.mrf.mxu0
        %v585 = vadd.f32 0.0, %v584
        %586 = vdwg.mxu0
        %v587 = vsel %vm308, %v585, -1e+30
        %v588 = vsel %vm431, %v587, -inf
        %589 = vmax.xlane.f32.xlu0 %v588
        %v590 = vpop.xlane.xlu0 %589
        %v591 = vsub.f32 %v587, %v590
        %v592 = vmul.f32 %v591, 1.442695
        %v593 = vpow.pop %v592
        %v594 = vsel %vm431, %v593, 0.0
        %595 = vadd.xlane.f32.xlu0 %v594
        %v596 = vpop.xlane.xlu0 %595
        %v597 = vrcp.pop %v596
        %v598 = vmul.f32 %v593, %v597
        %599 = vrot.lane.b32.xlu0 %v401, 64
        %v600 = vpop.permute.xlu0 %599
        %v603 = vsel %vm431, %v598, 0
        %605 = vmatpush.msra.mxu0 0.0
        %606 = vmatpush.msra.mxu0 0.0
        %607 = vmatpush.msra.mxu0 0.0
        %608 = vmatpush.msra.mxu0 0.0
        %609 = vmatpush.msra.mxu0 0.0
        %610 = vmatpush.msra.mxu0 0.0
        %611 = vmatpush.msra.mxu0 0.0
        %612 = vmatpush.msra.mxu0 0.0
        %613 = vmatpush.msra.mxu0 0.0
        %614 = vmatpush.msra.mxu0 0.0
        %615 = vmatpush.msra.mxu0 0.0
        %616 = vmatpush.msra.mxu0 0.0
        %617 = vmatpush.msra.mxu0 0.0
        %618 = vmatpush.msra.mxu0 0.0
        %619 = vmatpush.msra.mxu0 0.0
        %620 = vmatpush.msra.mxu0 %v600
        %621 = vmatmul.f32.gmra.mxu0 %v603
        %v622 = vpop.f32.mrf.mxu0
        %v623 = vadd.f32 0.0, %v622
        %624 = vdwg.mxu0
        %v625 = vadd.f32 %v557, %v623
        %626 = vrot.lane.b32.xlu0 %v413, 104
        %v627 = vpop.permute.xlu0 %626
        %628 = vrot.lane.b32.xlu0 %v427, 40
        %v629 = vpop.permute.xlu0 %628
        %v630 = vsel %vm431, %v627, 0
        %v632 = vsel %vm431, %v629, 0
        %634 = vmatpush.xpose.msra.mxu0 0.0
        %635 = vmatpush.xpose.msra.mxu0 0.0
        %636 = vmatpush.xpose.msra.mxu0 0.0
        %637 = vmatpush.xpose.msra.mxu0 0.0
        %638 = vmatpush.xpose.msra.mxu0 0.0
        %639 = vmatpush.xpose.msra.mxu0 0.0
        %640 = vmatpush.xpose.msra.mxu0 0.0
        %641 = vmatpush.xpose.msra.mxu0 0.0
        %642 = vmatpush.xpose.msra.mxu0 0.0
        %643 = vmatpush.xpose.msra.mxu0 0.0
        %644 = vmatpush.xpose.msra.mxu0 0.0
        %645 = vmatpush.xpose.msra.mxu0 0.0
        %646 = vmatpush.xpose.msra.mxu0 0.0
        %647 = vmatpush.xpose.msra.mxu0 0.0
        %648 = vmatpush.xpose.msra.mxu0 0.0
        %649 = vmatpush.xpose.msra.mxu0 %v632
        %650 = vmatmul.f32.gmra.mxu0 %v630
        %v651 = vpop.f32.mrf.mxu0
        %v652 = vadd.f32 0.0, %v651
        %653 = vdwg.mxu0
        %v654 = vsel %vm308, %v652, -1e+30
        %v655 = vsel %vm431, %v654, -inf
        %656 = vmax.xlane.f32.xlu0 %v655
        %v657 = vpop.xlane.xlu0 %656
        %v658 = vsub.f32 %v654, %v657
        %v659 = vmul.f32 %v658, 1.442695
        %v660 = vpow.pop %v659
        %v661 = vsel %vm431, %v660, 0.0
        %662 = vadd.xlane.f32.xlu0 %v661
        %v663 = vpop.xlane.xlu0 %662
        %v664 = vrcp.pop %v663
        %v665 = vmul.f32 %v660, %v664
        %666 = vrot.lane.b32.xlu0 %v401, 32
        %v667 = vpop.permute.xlu0 %666
        %v670 = vsel %vm431, %v665, 0
        %672 = vmatpush.msra.mxu0 0.0
        %673 = vmatpush.msra.mxu0 0.0
        %674 = vmatpush.msra.mxu0 0.0
        %675 = vmatpush.msra.mxu0 0.0
        %676 = vmatpush.msra.mxu0 0.0
        %677 = vmatpush.msra.mxu0 0.0
        %678 = vmatpush.msra.mxu0 0.0
        %679 = vmatpush.msra.mxu0 0.0
        %680 = vmatpush.msra.mxu0 0.0
        %681 = vmatpush.msra.mxu0 0.0
        %682 = vmatpush.msra.mxu0 0.0
        %683 = vmatpush.msra.mxu0 0.0
        %684 = vmatpush.msra.mxu0 0.0
        %685 = vmatpush.msra.mxu0 0.0
        %686 = vmatpush.msra.mxu0 0.0
        %687 = vmatpush.msra.mxu0 %v667
        %688 = vmatmul.f32.gmra.mxu0 %v670
        %v689 = vpop.f32.mrf.mxu0
        %v690 = vadd.f32 0.0, %v689
        %691 = vdwg.mxu0
        %v692 = vadd.f32 %v625, %v690
        %v693 = vadd.f32 %v301, %v692
        %v694 = vmul.f32 %v693, %v693
        %v695 = vsel %vm332, %v694, 0.0
        %696 = vadd.xlane.f32.xlu0 %v695
        %v697 = vpop.xlane.xlu0 %696
        %v698 = vmul.f32 %v697, %v342
        %v699 = vadd.f32 %v698, 1e-06
        %v700 = vrsqrt.pop %v699
        %v701 = vmul.f32 %v700, %v699
        %v702 = vmul.f32 %v701, %v700
        %v703 = vmul.f32 0.5, %v702
        %v704 = vsub.f32 1.5, %v703
        %v705 = vmul.f32 %v700, %v704
        %vm706 = vweird.f32 %v699
        %vm707 = vweird.f32 %v700
        %vm708 = vmor %vm706, %vm707
        %v709 = vsel %vm708, %v700, %v705
        %v710 = vmul.f32 %v693, %v709
        %v712 = vperm.slane %v318, 0
        %v714 = vmul.f32 %v710, %v712
        %v716 = vsel %vm332, %v714, 0
        %718 = vmatpush.msra.mxu0 0.0
        %719 = vmatpush.msra.mxu0 0.0
        %720 = vmatpush.msra.mxu0 0.0
        %721 = vmatpush.msra.mxu0 0.0
        %722 = vmatpush.msra.mxu0 0.0
        %723 = vmatpush.msra.mxu0 0.0
        %724 = vmatpush.msra.mxu0 0.0
        %725 = vmatpush.msra.mxu0 0.0
        %726 = vmatpush.msra.mxu0 0.0
        %727 = vmatpush.msra.mxu0 0.0
        %728 = vmatpush.msra.mxu0 0.0
        %729 = vmatpush.msra.mxu0 0.0
        %730 = vmatpush.msra.mxu0 %v322
        %731 = vmatpush.msra.mxu0 %v321
        %732 = vmatpush.msra.mxu0 %v320
        %733 = vmatpush.msra.mxu0 %v319
        %734 = vmatmul.f32.gmra.mxu0 %v716
        %v735 = vpop.f32.mrf.mxu0
        %v736 = vadd.f32 0.0, %v735
        %737 = vdwg.mxu0
        %v738 = vxor.u32 %v736, 2147483648
        %v739 = vmul.f32 %v738, 1.442695
        %v740 = vpow.pop %v739
        %v741 = vadd.f32 %v740, 1.0
        %v742 = vrcp.pop %v741
        %v743 = vmul.f32 %v741, %v742
        %v744 = vsub.f32 1.0, %v743
        %v745 = vmul.f32 %v742, %v744
        %v746 = vadd.f32 %v742, %v745
        %vm747 = vweird.f32 %v741
        %vm748 = vweird.f32 %v742
        %vm749 = vmor %vm747, %vm748
        %v750 = vsel %vm749, %v742, %v746
        %v751 = vand.u32 2147483647, %v741
        %vm752 = vcmp.eq.f32.partialorder %v751, 8.507059e+37
        %v753 = vand.u32 %v741, 2147483648
        %v754 = vor.u32 1.1754944e-38, %v753
        %v755 = vsel %vm752, %v754, %v750
        %v756 = vmul.f32 1.0, %v755
        %v757 = vmul.f32 %v736, %v756
        %759 = vrot.lane.b32.xlu0 %v736, 64
        %v760 = vpop.permute.xlu0 %759
        %v762 = vmul.f32 %v757, %v760
        %vm763 = vcmask 523264
        %v765 = vsel %vm763, %v762, 0
        %767 = vmatpush.msra.mxu0 0.0
        %768 = vmatpush.msra.mxu0 0.0
        %769 = vmatpush.msra.mxu0 0.0
        %770 = vmatpush.msra.mxu0 0.0
        %771 = vmatpush.msra.mxu0 0.0
        %772 = vmatpush.msra.mxu0 0.0
        %773 = vmatpush.msra.mxu0 0.0
        %774 = vmatpush.msra.mxu0 0.0
        %775 = vmatpush.msra.mxu0 %v330
        %776 = vmatpush.msra.mxu0 %v329
        %777 = vmatpush.msra.mxu0 %v328
        %778 = vmatpush.msra.mxu0 %v327
        %779 = vmatpush.msra.mxu0 %v326
        %780 = vmatpush.msra.mxu0 %v325
        %781 = vmatpush.msra.mxu0 %v324
        %782 = vmatpush.msra.mxu0 %v323
        %783 = vmatmul.f32.gmra.mxu0 %v765
        %v784 = vpop.f32.mrf.mxu0
        %v785 = vadd.f32 0.0, %v784
        %786 = vdwg.mxu0
        %v787 = vadd.f32 %v693, %v785
        %s788 = scalar_lea.vmem %s3, 1
        %v789 = vld [vmem:[%s788] sm:$0x1]
        %s790 = scalar_lea.vmem %s4, 64
        %v791 = vld [vmem:[%s790] sm:$0xff]
        %v792 = vld [vmem:[%s790 + $0x8] sm:$0xff]
        %v793 = vld [vmem:[%s790 + $0x10] sm:$0xff]
        %v794 = vld [vmem:[%s790 + $0x18] sm:$0xff]
        %v795 = vld [vmem:[%s790 + $0x20] sm:$0xff]
        %v796 = vld [vmem:[%s790 + $0x28] sm:$0xff]
        %v797 = vld [vmem:[%s790 + $0x30] sm:$0xff]
        %v798 = vld [vmem:[%s790 + $0x38] sm:$0xff]
        %s799 = scalar_lea.vmem %s5, 1
        %v800 = vld [vmem:[%s799] sm:$0x1]
        %s801 = scalar_lea.vmem %s6, 32
        %v802 = vld [vmem:[%s801] sm:$0xff]
        %v803 = vld [vmem:[%s801 + $0x8] sm:$0xff]
        %v804 = vld [vmem:[%s801 + $0x10] sm:$0xff]
        %v805 = vld [vmem:[%s801 + $0x18] sm:$0xff]
        %s806 = scalar_lea.vmem %s7, 64
        %v807 = vld [vmem:[%s806] sm:$0xff]
        %v808 = vld [vmem:[%s806 + $0x8] sm:$0xff]
        %v809 = vld [vmem:[%s806 + $0x10] sm:$0xff]
        %v810 = vld [vmem:[%s806 + $0x18] sm:$0xff]
        %v811 = vld [vmem:[%s806 + $0x20] sm:$0xff]
        %v812 = vld [vmem:[%s806 + $0x28] sm:$0xff]
        %v813 = vld [vmem:[%s806 + $0x30] sm:$0xff]
        %v814 = vld [vmem:[%s806 + $0x38] sm:$0xff]
        %v815 = vmul.f32 %v787, %v787
        %v816 = vsel %vm332, %v815, 0.0
        %817 = vadd.xlane.f32.xlu0 %v816
        %v818 = vpop.xlane.xlu0 %817
        %v819 = vmul.f32 %v818, %v342
        %v820 = vadd.f32 %v819, 1e-06
        %v821 = vrsqrt.pop %v820
        %v822 = vmul.f32 %v821, %v820
        %v823 = vmul.f32 %v822, %v821
        %v824 = vmul.f32 0.5, %v823
        %v825 = vsub.f32 1.5, %v824
        %v826 = vmul.f32 %v821, %v825
        %vm827 = vweird.f32 %v820
        %vm828 = vweird.f32 %v821
        %vm829 = vmor %vm827, %vm828
        %v830 = vsel %vm829, %v821, %v826
        %v831 = vmul.f32 %v787, %v830
        %v833 = vperm.slane %v789, 0
        %v835 = vmul.f32 %v831, %v833
        %v837 = vsel %vm332, %v835, 0
        %839 = vmatpush.msra.mxu0 0.0
        %840 = vmatpush.msra.mxu0 0.0
        %841 = vmatpush.msra.mxu0 0.0
        %842 = vmatpush.msra.mxu0 0.0
        %843 = vmatpush.msra.mxu0 0.0
        %844 = vmatpush.msra.mxu0 0.0
        %845 = vmatpush.msra.mxu0 0.0
        %846 = vmatpush.msra.mxu0 0.0
        %847 = vmatpush.msra.mxu0 0.0
        %848 = vmatpush.msra.mxu0 0.0
        %849 = vmatpush.msra.mxu0 0.0
        %850 = vmatpush.msra.mxu0 0.0
        %851 = vmatpush.msra.mxu0 %v797
        %852 = vmatpush.msra.mxu0 %v795
        %853 = vmatpush.msra.mxu0 %v793
        %854 = vmatpush.msra.mxu0 %v791
        %855 = vmatmul.f32.gmra.mxu0 %v837
        %v856 = vpop.f32.mrf.mxu0
        %v857 = vadd.f32 0.0, %v856
        %858 = vdwg.mxu0
        %859 = vmatpush.msra.mxu0 0.0
        %860 = vmatpush.msra.mxu0 0.0
        %861 = vmatpush.msra.mxu0 0.0
        %862 = vmatpush.msra.mxu0 0.0
        %863 = vmatpush.msra.mxu0 0.0
        %864 = vmatpush.msra.mxu0 0.0
        %865 = vmatpush.msra.mxu0 0.0
        %866 = vmatpush.msra.mxu0 0.0
        %867 = vmatpush.msra.mxu0 0.0
        %868 = vmatpush.msra.mxu0 0.0
        %869 = vmatpush.msra.mxu0 0.0
        %870 = vmatpush.msra.mxu0 0.0
        %871 = vmatpush.msra.mxu0 %v798
        %872 = vmatpush.msra.mxu0 %v796
        %873 = vmatpush.msra.mxu0 %v794
        %874 = vmatpush.msra.mxu0 %v792
        %875 = vmatmul.f32.gmra.mxu0 %v837
        %v876 = vpop.f32.mrf.mxu0
        %v877 = vadd.f32 0.0, %v876
        %878 = vdwg.mxu0
        %v879 = vmul.f32 %v857, %v302
        %v880 = vmul.f32 %v857, %v406
        %882 = vrot.lane.b32.xlu0 %v880, 96
        %v883 = vpop.permute.xlu0 %882
        %v885 = vadd.f32 %v879, %v883
        %v886 = vmul.f32 %v857, %v416
        %v887 = vmul.f32 %v857, %v420
        %889 = vrot.lane.b32.xlu0 %v887, 96
        %v890 = vpop.permute.xlu0 %889
        %v892 = vadd.f32 %v886, %v890
        %894 = vrot.lane.b32.xlu0 %v892, 64
        %v895 = vpop.permute.xlu0 %894
        %v897 = vsel %vm431, %v885, 0
        %v899 = vsel %vm431, %v895, 0
        %901 = vmatpush.xpose.msra.mxu0 0.0
        %902 = vmatpush.xpose.msra.mxu0 0.0
        %903 = vmatpush.xpose.msra.mxu0 0.0
        %904 = vmatpush.xpose.msra.mxu0 0.0
        %905 = vmatpush.xpose.msra.mxu0 0.0
        %906 = vmatpush.xpose.msra.mxu0 0.0
        %907 = vmatpush.xpose.msra.mxu0 0.0
        %908 = vmatpush.xpose.msra.mxu0 0.0
        %909 = vmatpush.xpose.msra.mxu0 0.0
        %910 = vmatpush.xpose.msra.mxu0 0.0
        %911 = vmatpush.xpose.msra.mxu0 0.0
        %912 = vmatpush.xpose.msra.mxu0 0.0
        %913 = vmatpush.xpose.msra.mxu0 0.0
        %914 = vmatpush.xpose.msra.mxu0 0.0
        %915 = vmatpush.xpose.msra.mxu0 0.0
        %916 = vmatpush.xpose.msra.mxu0 %v899
        %917 = vmatmul.f32.gmra.mxu0 %v897
        %v918 = vpop.f32.mrf.mxu0
        %v919 = vadd.f32 0.0, %v918
        %920 = vdwg.mxu0
        %v921 = vsel %vm308, %v919, -1e+30
        %v922 = vsel %vm431, %v921, -inf
        %923 = vmax.xlane.f32.xlu0 %v922
        %v924 = vpop.xlane.xlu0 %923
        %v925 = vsub.f32 %v921, %v924
        %v926 = vmul.f32 %v925, 1.442695
        %v927 = vpow.pop %v926
        %v928 = vsel %vm431, %v927, 0.0
        %929 = vadd.xlane.f32.xlu0 %v928
        %v930 = vpop.xlane.xlu0 %929
        %v931 = vrcp.pop %v930
        %v932 = vmul.f32 %v927, %v931
        %933 = vrot.lane.b32.xlu0 %v885, 120
        %v934 = vpop.permute.xlu0 %933
        %935 = vrot.lane.b32.xlu0 %v892, 56
        %v936 = vpop.permute.xlu0 %935
        %v937 = vsel %vm431, %v934, 0
        %v939 = vsel %vm431, %v936, 0
        %941 = vmatpush.xpose.msra.mxu0 0.0
        %942 = vmatpush.xpose.msra.mxu0 0.0
        %943 = vmatpush.xpose.msra.mxu0 0.0
        %944 = vmatpush.xpose.msra.mxu0 0.0
        %945 = vmatpush.xpose.msra.mxu0 0.0
        %946 = vmatpush.xpose.msra.mxu0 0.0
        %947 = vmatpush.xpose.msra.mxu0 0.0
        %948 = vmatpush.xpose.msra.mxu0 0.0
        %949 = vmatpush.xpose.msra.mxu0 0.0
        %950 = vmatpush.xpose.msra.mxu0 0.0
        %951 = vmatpush.xpose.msra.mxu0 0.0
        %952 = vmatpush.xpose.msra.mxu0 0.0
        %953 = vmatpush.xpose.msra.mxu0 0.0
        %954 = vmatpush.xpose.msra.mxu0 0.0
        %955 = vmatpush.xpose.msra.mxu0 0.0
        %956 = vmatpush.xpose.msra.mxu0 %v939
        %957 = vmatmul.f32.gmra.mxu0 %v937
        %v958 = vpop.f32.mrf.mxu0
        %v959 = vadd.f32 0.0, %v958
        %960 = vdwg.mxu0
        %v961 = vsel %vm308, %v959, -1e+30
        %v962 = vsel %vm431, %v961, -inf
        %963 = vmax.xlane.f32.xlu0 %v962
        %v964 = vpop.xlane.xlu0 %963
        %v965 = vsub.f32 %v961, %v964
        %v966 = vmul.f32 %v965, 1.442695
        %v967 = vpow.pop %v966
        %v968 = vsel %vm431, %v967, 0.0
        %969 = vadd.xlane.f32.xlu0 %v968
        %v970 = vpop.xlane.xlu0 %969
        %v971 = vrcp.pop %v970
        %v972 = vmul.f32 %v967, %v971
        %974 = vrot.lane.b32.xlu0 %v877, 96
        %v975 = vpop.permute.xlu0 %974
        %v978 = vsel %vm431, %v972, 0
        %980 = vmatpush.msra.mxu0 0.0
        %981 = vmatpush.msra.mxu0 0.0
        %982 = vmatpush.msra.mxu0 0.0
        %983 = vmatpush.msra.mxu0 0.0
        %984 = vmatpush.msra.mxu0 0.0
        %985 = vmatpush.msra.mxu0 0.0
        %986 = vmatpush.msra.mxu0 0.0
        %987 = vmatpush.msra.mxu0 0.0
        %988 = vmatpush.msra.mxu0 0.0
        %989 = vmatpush.msra.mxu0 0.0
        %990 = vmatpush.msra.mxu0 0.0
        %991 = vmatpush.msra.mxu0 0.0
        %992 = vmatpush.msra.mxu0 0.0
        %993 = vmatpush.msra.mxu0 0.0
        %994 = vmatpush.msra.mxu0 0.0
        %995 = vmatpush.msra.mxu0 %v975
        %996 = vmatmul.f32.gmra.mxu0 %v978
        %v997 = vpop.f32.mrf.mxu0
        %v998 = vadd.f32 0.0, %v997
        %999 = vdwg.mxu0
        %v1001 = vsel %vm431, %v932, 0
        %1003 = vmatpush.msra.mxu0 0.0
        %1004 = vmatpush.msra.mxu0 0.0
        %1005 = vmatpush.msra.mxu0 0.0
        %1006 = vmatpush.msra.mxu0 0.0
        %1007 = vmatpush.msra.mxu0 0.0
        %1008 = vmatpush.msra.mxu0 0.0
        %1009 = vmatpush.msra.mxu0 0.0
        %1010 = vmatpush.msra.mxu0 0.0
        %1011 = vmatpush.msra.mxu0 0.0
        %1012 = vmatpush.msra.mxu0 0.0
        %1013 = vmatpush.msra.mxu0 0.0
        %1014 = vmatpush.msra.mxu0 0.0
        %1015 = vmatpush.msra.mxu0 0.0
        %1016 = vmatpush.msra.mxu0 0.0
        %1017 = vmatpush.msra.mxu0 0.0
        %1018 = vmatpush.msra.mxu0 %v877
        %1019 = vmatmul.f32.gmra.mxu0 %v1001
        %v1020 = vpop.f32.mrf.mxu0
        %v1021 = vadd.f32 %v998, %v1020
        %1022 = vdwg.mxu0
        %1023 = vrot.lane.b32.xlu0 %v885, 112
        %v1024 = vpop.permute.xlu0 %1023
        %1025 = vrot.lane.b32.xlu0 %v892, 48
        %v1026 = vpop.permute.xlu0 %1025
        %v1027 = vsel %vm431, %v1024, 0
        %v1029 = vsel %vm431, %v1026, 0
        %1031 = vmatpush.xpose.msra.mxu0 0.0
        %1032 = vmatpush.xpose.msra.mxu0 0.0
        %1033 = vmatpush.xpose.msra.mxu0 0.0
        %1034 = vmatpush.xpose.msra.mxu0 0.0
        %1035 = vmatpush.xpose.msra.mxu0 0.0
        %1036 = vmatpush.xpose.msra.mxu0 0.0
        %1037 = vmatpush.xpose.msra.mxu0 0.0
        %1038 = vmatpush.xpose.msra.mxu0 0.0
        %1039 = vmatpush.xpose.msra.mxu0 0.0
        %1040 = vmatpush.xpose.msra.mxu0 0.0
        %1041 = vmatpush.xpose.msra.mxu0 0.0
        %1042 = vmatpush.xpose.msra.mxu0 0.0
        %1043 = vmatpush.xpose.msra.mxu0 0.0
        %1044 = vmatpush.xpose.msra.mxu0 0.0
        %1045 = vmatpush.xpose.msra.mxu0 0.0
        %1046 = vmatpush.xpose.msra.mxu0 %v1029
        %1047 = vmatmul.f32.gmra.mxu0 %v1027
        %v1048 = vpop.f32.mrf.mxu0
        %v1049 = vadd.f32 0.0, %v1048
        %1050 = vdwg.mxu0
        %v1051 = vsel %vm308, %v1049, -1e+30
        %v1052 = vsel %vm431, %v1051, -inf
        %1053 = vmax.xlane.f32.xlu0 %v1052
        %v1054 = vpop.xlane.xlu0 %1053
        %v1055 = vsub.f32 %v1051, %v1054
        %v1056 = vmul.f32 %v1055, 1.442695
        %v1057 = vpow.pop %v1056
        %v1058 = vsel %vm431, %v1057, 0.0
        %1059 = vadd.xlane.f32.xlu0 %v1058
        %v1060 = vpop.xlane.xlu0 %1059
        %v1061 = vrcp.pop %v1060
        %v1062 = vmul.f32 %v1057, %v1061
        %1063 = vrot.lane.b32.xlu0 %v877, 64
        %v1064 = vpop.permute.xlu0 %1063
        %v1067 = vsel %vm431, %v1062, 0
        %1069 = vmatpush.msra.mxu0 0.0
        %1070 = vmatpush.msra.mxu0 0.0
        %1071 = vmatpush.msra.mxu0 0.0
        %1072 = vmatpush.msra.mxu0 0.0
        %1073 = vmatpush.msra.mxu0 0.0
        %1074 = vmatpush.msra.mxu0 0.0
        %1075 = vmatpush.msra.mxu0 0.0
        %1076 = vmatpush.msra.mxu0 0.0
        %1077 = vmatpush.msra.mxu0 0.0
        %1078 = vmatpush.msra.mxu0 0.0
        %1079 = vmatpush.msra.mxu0 0.0
        %1080 = vmatpush.msra.mxu0 0.0
        %1081 = vmatpush.msra.mxu0 0.0
        %1082 = vmatpush.msra.mxu0 0.0
        %1083 = vmatpush.msra.mxu0 0.0
        %1084 = vmatpush.msra.mxu0 %v1064
        %1085 = vmatmul.f32.gmra.mxu0 %v1067
        %v1086 = vpop.f32.mrf.mxu0
        %v1087 = vadd.f32 0.0, %v1086
        %1088 = vdwg.mxu0
        %v1089 = vadd.f32 %v1021, %v1087
        %1090 = vrot.lane.b32.xlu0 %v885, 104
        %v1091 = vpop.permute.xlu0 %1090
        %1092 = vrot.lane.b32.xlu0 %v892, 40
        %v1093 = vpop.permute.xlu0 %1092
        %v1094 = vsel %vm431, %v1091, 0
        %v1096 = vsel %vm431, %v1093, 0
        %1098 = vmatpush.xpose.msra.mxu0 0.0
        %1099 = vmatpush.xpose.msra.mxu0 0.0
        %1100 = vmatpush.xpose.msra.mxu0 0.0
        %1101 = vmatpush.xpose.msra.mxu0 0.0
        %1102 = vmatpush.xpose.msra.mxu0 0.0
        %1103 = vmatpush.xpose.msra.mxu0 0.0
        %1104 = vmatpush.xpose.msra.mxu0 0.0
        %1105 = vmatpush.xpose.msra.mxu0 0.0
        %1106 = vmatpush.xpose.msra.mxu0 0.0
        %1107 = vmatpush.xpose.msra.mxu0 0.0
        %1108 = vmatpush.xpose.msra.mxu0 0.0
        %1109 = vmatpush.xpose.msra.mxu0 0.0
        %1110 = vmatpush.xpose.msra.mxu0 0.0
        %1111 = vmatpush.xpose.msra.mxu0 0.0
        %1112 = vmatpush.xpose.msra.mxu0 0.0
        %1113 = vmatpush.xpose.msra.mxu0 %v1096
        %1114 = vmatmul.f32.gmra.mxu0 %v1094
        %v1115 = vpop.f32.mrf.mxu0
        %v1116 = vadd.f32 0.0, %v1115
        %1117 = vdwg.mxu0
        %v1118 = vsel %vm308, %v1116, -1e+30
        %v1119 = vsel %vm431, %v1118, -inf
        %1120 = vmax.xlane.f32.xlu0 %v1119
        %v1121 = vpop.xlane.xlu0 %1120
        %v1122 = vsub.f32 %v1118, %v1121
        %v1123 = vmul.f32 %v1122, 1.442695
        %v1124 = vpow.pop %v1123
        %v1125 = vsel %vm431, %v1124, 0.0
        %1126 = vadd.xlane.f32.xlu0 %v1125
        %v1127 = vpop.xlane.xlu0 %1126
        %v1128 = vrcp.pop %v1127
        %v1129 = vmul.f32 %v1124, %v1128
        %1130 = vrot.lane.b32.xlu0 %v877, 32
        %v1131 = vpop.permute.xlu0 %1130
        %v1134 = vsel %vm431, %v1129, 0
        %1136 = vmatpush.msra.mxu0 0.0
        %1137 = vmatpush.msra.mxu0 0.0
        %1138 = vmatpush.msra.mxu0 0.0
        %1139 = vmatpush.msra.mxu0 0.0
        %1140 = vmatpush.msra.mxu0 0.0
        %1141 = vmatpush.msra.mxu0 0.0
        %1142 = vmatpush.msra.mxu0 0.0
        %1143 = vmatpush.msra.mxu0 0.0
        %1144 = vmatpush.msra.mxu0 0.0
        %1145 = vmatpush.msra.mxu0 0.0
        %1146 = vmatpush.msra.mxu0 0.0
        %1147 = vmatpush.msra.mxu0 0.0
        %1148 = vmatpush.msra.mxu0 0.0
        %1149 = vmatpush.msra.mxu0 0.0
        %1150 = vmatpush.msra.mxu0 0.0
        %1151 = vmatpush.msra.mxu0 %v1131
        %1152 = vmatmul.f32.gmra.mxu0 %v1134
        %v1153 = vpop.f32.mrf.mxu0
        %v1154 = vadd.f32 0.0, %v1153
        %1155 = vdwg.mxu0
        %v1156 = vadd.f32 %v1089, %v1154
        %v1157 = vadd.f32 %v787, %v1156
        %v1158 = vmul.f32 %v1157, %v1157
        %v1159 = vsel %vm332, %v1158, 0.0
        %1160 = vadd.xlane.f32.xlu0 %v1159
        %v1161 = vpop.xlane.xlu0 %1160
        %v1162 = vmul.f32 %v1161, %v342
        %v1163 = vadd.f32 %v1162, 1e-06
        %v1164 = vrsqrt.pop %v1163
        %v1165 = vmul.f32 %v1164, %v1163
        %v1166 = vmul.f32 %v1165, %v1164
        %v1167 = vmul.f32 0.5, %v1166
        %v1168 = vsub.f32 1.5, %v1167
        %v1169 = vmul.f32 %v1164, %v1168
        %vm1170 = vweird.f32 %v1163
        %vm1171 = vweird.f32 %v1164
        %vm1172 = vmor %vm1170, %vm1171
        %v1173 = vsel %vm1172, %v1164, %v1169
        %v1174 = vmul.f32 %v1157, %v1173
        %v1176 = vperm.slane %v800, 0
        %v1178 = vmul.f32 %v1174, %v1176
        %v1180 = vsel %vm332, %v1178, 0
        %1182 = vmatpush.msra.mxu0 0.0
        %1183 = vmatpush.msra.mxu0 0.0
        %1184 = vmatpush.msra.mxu0 0.0
        %1185 = vmatpush.msra.mxu0 0.0
        %1186 = vmatpush.msra.mxu0 0.0
        %1187 = vmatpush.msra.mxu0 0.0
        %1188 = vmatpush.msra.mxu0 0.0
        %1189 = vmatpush.msra.mxu0 0.0
        %1190 = vmatpush.msra.mxu0 0.0
        %1191 = vmatpush.msra.mxu0 0.0
        %1192 = vmatpush.msra.mxu0 0.0
        %1193 = vmatpush.msra.mxu0 0.0
        %1194 = vmatpush.msra.mxu0 %v805
        %1195 = vmatpush.msra.mxu0 %v804
        %1196 = vmatpush.msra.mxu0 %v803
        %1197 = vmatpush.msra.mxu0 %v802
        %1198 = vmatmul.f32.gmra.mxu0 %v1180
        %v1199 = vpop.f32.mrf.mxu0
        %v1200 = vadd.f32 0.0, %v1199
        %1201 = vdwg.mxu0
        %v1202 = vxor.u32 %v1200, 2147483648
        %v1203 = vmul.f32 %v1202, 1.442695
        %v1204 = vpow.pop %v1203
        %v1205 = vadd.f32 %v1204, 1.0
        %v1206 = vrcp.pop %v1205
        %v1207 = vmul.f32 %v1205, %v1206
        %v1208 = vsub.f32 1.0, %v1207
        %v1209 = vmul.f32 %v1206, %v1208
        %v1210 = vadd.f32 %v1206, %v1209
        %vm1211 = vweird.f32 %v1205
        %vm1212 = vweird.f32 %v1206
        %vm1213 = vmor %vm1211, %vm1212
        %v1214 = vsel %vm1213, %v1206, %v1210
        %v1215 = vand.u32 2147483647, %v1205
        %vm1216 = vcmp.eq.f32.partialorder %v1215, 8.507059e+37
        %v1217 = vand.u32 %v1205, 2147483648
        %v1218 = vor.u32 1.1754944e-38, %v1217
        %v1219 = vsel %vm1216, %v1218, %v1214
        %v1220 = vmul.f32 1.0, %v1219
        %v1221 = vmul.f32 %v1200, %v1220
        %1223 = vrot.lane.b32.xlu0 %v1200, 64
        %v1224 = vpop.permute.xlu0 %1223
        %v1226 = vmul.f32 %v1221, %v1224
        %v1228 = vsel %vm763, %v1226, 0
        %1230 = vmatpush.msra.mxu0 0.0
        %1231 = vmatpush.msra.mxu0 0.0
        %1232 = vmatpush.msra.mxu0 0.0
        %1233 = vmatpush.msra.mxu0 0.0
        %1234 = vmatpush.msra.mxu0 0.0
        %1235 = vmatpush.msra.mxu0 0.0
        %1236 = vmatpush.msra.mxu0 0.0
        %1237 = vmatpush.msra.mxu0 0.0
        %1238 = vmatpush.msra.mxu0 %v814
        %1239 = vmatpush.msra.mxu0 %v813
        %1240 = vmatpush.msra.mxu0 %v812
        %1241 = vmatpush.msra.mxu0 %v811
        %1242 = vmatpush.msra.mxu0 %v810
        %1243 = vmatpush.msra.mxu0 %v809
        %1244 = vmatpush.msra.mxu0 %v808
        %1245 = vmatpush.msra.mxu0 %v807
        %1246 = vmatmul.f32.gmra.mxu0 %v1228
        %v1247 = vpop.f32.mrf.mxu0
        %v1248 = vadd.f32 0.0, %v1247
        %1249 = vdwg.mxu0
        %v1250 = vadd.f32 %v1157, %v1248
        %1251 = vst.msk [vmem:[%s296] sm:$0xff] %vm332, %v1250
        %s1252 = sand.u32 %s203, 1
        %s1253 = scalar_lea.sflag [#allocation3], %s1252
        %s1254 = sand.u32 %s203, 1
        %s1255 = smul.addr %s1254, 8
        %s1256 = scalar_lea.vmem [#allocation2], %s1255
        // Predicated region
        $region53: #{llama_first_half.1} parent=51 // pred_check
          %p1257 = pneg %p213
        $region54: #{llama_first_half.1} parent=51 // pred_check_branch
          %1259 = sbr.rel (%p1257) target = $region56
        $region55: #{llama_first_half.1} parent=51 // pred_region
          %1261 = vsyncadd %s1253, 0
          %s1262 = smul.addr %s22, 8
          %s1263 = scalar_lea.hbm %s8, %s1262
          %s1265 = sshll.u32 %s1256, 4
          %s1266 = int_to_ptr.vmem [resolvable:$true] %s1265
          %s1267 = sshll.u32 %s1263, 4
          %s1268 = int_to_ptr.hbm [resolvable:$true] %s1267
          %1270 = dma.vmem_to_hbm [thread:$0]  %s1266, 128, %s1268, %s1253
        $region56: #{llama_first_half.1} parent=51 // pred_fallthru
          _
      $region52: #{llama_first_half.1} parent=5 // pred_fallthru
        _
      %p1271 = scmp.le.s32.totalorder 2, %s17
      // Predicated region
      $region57: #{llama_first_half.1} parent=5 // pred_check
        %p1272 = pneg %p1271
      $region58: #{llama_first_half.1} parent=5 // pred_check_branch
        %1274 = sbr.rel (%p1272) target = $region60
      $region59: #{llama_first_half.1} parent=5 // pred_region
        %s1275 = ssub.s32 %s17, 2
        // Predicated region
        $region61: #{llama_first_half.1} parent=59 // pred_check
          %p1276 = pneg %p219
        $region62: #{llama_first_half.1} parent=59 // pred_check_branch
          %1278 = sbr.rel (%p1276) target = $region64
        $region63: #{llama_first_half.1} parent=59 // pred_region
          %s1279 = sand.u32 %s204, 1
          %s1280 = scalar_lea.sflag [#allocation3], %s1279
          %s1281 = sand.u32 %s204, 1
          %s1282 = smul.addr %s1281, 8
          %s1283 = scalar_lea.vmem [#allocation2], %s1282
          %1285 = dma.done %s1280, 128
        $region64: #{llama_first_half.1} parent=59 // pred_fallthru
          _
      $region60: #{llama_first_half.1} parent=5 // pred_fallthru
        _
    $region6: #{llama_first_half.1} parent=1 // loop_footer
      %s21 = sadd.s32 1, %s17
    $region7: #{llama_first_half.1} parent=1 // loop_footer_branch
      %16 = sbr.rel target = $region3
    $region8: #{llama_first_half.1} parent=1 // loop_exit
      _
    %1286 = vsyncpa [#allocation3], 1
    %s1287 = scalar_lea.sflag [#allocation3], 1
    %1288 = vsyncpa %s1287, 1

</llo_original>
